<compile_context>
chip_gen: v7x
topology: tpu7x:2x2x1
jax: 0.10.0
libtpu: 0.0.40
codegen_flags: <defaults>
</compile_context>

<pallas_src>
import functools
import math

import jax
import jax.numpy as jnp
import numpy as np
from jax import lax
from jax.experimental import pallas as pl
from jax.experimental.pallas import tpu as pltpu


def _round_up(x, m):
    return ((x + m - 1) // m) * m


# ----------------------------------------------------------------------------
# Fused similarity kernel ('mm' and 'cos' share one MXU contraction)
# ----------------------------------------------------------------------------
def _fused_similarity_kernel(hs_ref, lab_ref, o_ref, *, normalize, mxu_dtype):
    """One (B-tile, C-tile) block of logits for ALL fused heads.

    hs_ref  : (block_b, L, H)    prompt-position hidden states (shared by heads)
    lab_ref : (block_c, L, H)    concatenated label2embed (zero padded classes)
    o_ref   : (block_b, block_c) float32 logits

    'mm'  : logits[b,c] = sum_{l,h} hs[b,l,h] * lab[c,l,h]
    'cos' : torch.nn.CosineSimilarity(dim=0, eps=1e-6) per hidden dim
            (cosine over the L axis), summed over H.
    """
    hs = hs_ref[...]
    lab = lab_ref[...]

    if normalize:
        # norm / eps math stays float32 on the VPU; rsqrt uses the EUP slot.
        hs32 = hs.astype(jnp.float32)
        lab32 = lab.astype(jnp.float32)
        # NOTE: eps handling clamps each L2 norm at sqrt(1e-6) instead of the
        # torch form max(||x||*||y||, 1e-6); results differ only for degenerate
        # (all-zero) prompt columns, and it maps the zero-padded class rows to
        # exactly-zero logits (sliced off by the wrapper anyway).
        inv_hs = lax.rsqrt(
            jnp.maximum(jnp.sum(hs32 * hs32, axis=1, keepdims=True), 1e-6))
        inv_lab = lax.rsqrt(
            jnp.maximum(jnp.sum(lab32 * lab32, axis=1, keepdims=True), 1e-6))
        hs = (hs32 * inv_hs).astype(mxu_dtype)
        lab = (lab32 * inv_lab).astype(mxu_dtype)
    else:
        hs = hs.astype(mxu_dtype)
        lab = lab.astype(mxu_dtype)

    # Contract over (L, H) as L small MXU matmuls along the lane-dense H axis.
    # The rhs arrives "transposed" ((C, H), contracting dim 1), which the MXU
    # handles natively -> no wrapper-side transpose padding C onto the lanes.
    L = hs.shape[1]
    acc = jnp.zeros(o_ref.shape, jnp.float32)
    for l in range(L):  # static, tiny (len_label); unrolled at trace time
        acc = acc + lax.dot_general(
            hs[:, l, :], lab[:, l, :],
            dimension_numbers=(((1,), (1,)), ((), ())),
            preferred_element_type=jnp.float32)

    # single final store of the full lane-dense (block_b, block_c) tile
    o_ref[...] = acc.astype(o_ref.dtype)


# ----------------------------------------------------------------------------
# pallas_call wrapper
# ----------------------------------------------------------------------------
def fused_vector_similarity(hidden_states_mask, label2embed, similarity, *,
                            matmul_dtype=jnp.bfloat16):
    """Pallas version of ETypePromptModel.vector_similarity, fused over heads.

    hidden_states_mask : (B, L, H)
    label2embed        : (C_total, L, H)  (all heads concatenated along C)
    returns logits     : (B, C_total) float32
    """
    if similarity not in ("mm", "cos"):
        raise ValueError("unknown similiarty")

    B, L, H = hidden_states_mask.shape
    C = label2embed.shape[0]
    assert label2embed.shape[1:] == (L, H)

    # Lane-dense class axis (multiple of 128) -> unmasked vector stores.
    # Padded classes are all-zero rows -> exactly-zero logits, sliced off below.
    C_pad = _round_up(C, 128)
    B_pad = _round_up(B, 8)

    # Tile caps chosen so double-buffered (hs, lab) tiles + output stay far
    # below v7x's 64 MiB VMEM even at H~1024, while still giving the MXU a
    # >=128-wide N.  (A K-reduction grid axis is unnecessary at these L*H.)
    block_b = math.gcd(B_pad, 128)
    block_c = math.gcd(C_pad, 256)

    # bf16 matmul inputs halve HBM/VMEM bytes; accumulation stays float32.
    hs = jnp.pad(hidden_states_mask.astype(matmul_dtype),
                 ((0, B_pad - B), (0, 0), (0, 0)))
    lab = jnp.pad(label2embed.astype(matmul_dtype),
                  ((0, C_pad - C), (0, 0), (0, 0)))

    kernel = functools.partial(_fused_similarity_kernel,
                               normalize=(similarity == "cos"),
                               mxu_dtype=matmul_dtype)

    out = pl.pallas_call(
        kernel,
        out_shape=jax.ShapeDtypeStruct((B_pad, C_pad), jnp.float32),
        grid=(B_pad // block_b, C_pad // block_c),
        in_specs=[
            # hs block keeps the same index across the C axis -> VMEM resident
            pl.BlockSpec((block_b, L, H), lambda i, j: (i, 0, 0)),
            pl.BlockSpec((block_c, L, H), lambda i, j: (j, 0, 0)),
        ],
        out_specs=pl.BlockSpec((block_b, block_c), lambda i, j: (i, j)),
        compiler_params=pltpu.CompilerParams(
            dimension_semantics=("parallel", "parallel")),
    )(hs, lab)

    return out[:B, :C]


def vector_similarity(hidden_states_mask, label2embed, similarity, *,
                      matmul_dtype=jnp.bfloat16):
    """Single-head convenience wrapper (parity with the PyTorch method)."""
    return fused_vector_similarity(hidden_states_mask, label2embed, similarity,
                                   matmul_dtype=matmul_dtype)


# ----------------------------------------------------------------------------
# Model glue (mirrors FullModel / ETypePromptModel structure)
# ----------------------------------------------------------------------------
class FullModelPallas:
    """JAX/Pallas counterpart of FullModel.

    The PyTorch FullModel.forward() is literally `pass`; the usable computation
    lives in the per-head ETypePromptModel forwards.  Here all heads are fused
    into one Pallas call and exposed through `predict_all`.

    # TODO(synk): the pretrained HuggingFace MLM transformer backbone is an
    # external module with no in-script definition; `hidden_states` stands for
    # its `last_hidden_state` output.
    """

    def __init__(self, subj_label2embed, obj_label2embed, rel_label2embeds,
                 similarity, matmul_dtype=jnp.bfloat16):
        heads = [("subj", subj_label2embed), ("obj", obj_label2embed)]
        for pair, emb in rel_label2embeds.items():
            # string keys (not tuples) so the output dict is a valid pytree
            heads.append(("rel/" + "/".join(pair), emb))

        L, H = heads[0][1].shape[1:]
        for _, emb in heads:
            assert emb.shape[1:] == (L, H), \
                "fused heads must share (len_label, hidden)"
        self.len_label = L
        self.similarity = similarity
        self.matmul_dtype = matmul_dtype

        # Fuse all heads: concatenate label2embed along the class axis once.
        self.label2embed_all = jnp.concatenate([emb for _, emb in heads], axis=0)
        self.head_slices = {}
        off = 0
        for name, emb in heads:
            self.head_slices[name] = (off, emb.shape[0])
            off += emb.shape[0]

    def predict_all(self, hidden_states, mlm_labels):
        L = self.len_label
        # Hoisted, executed ONCE for all heads:
        # hidden_states[mlm_labels >= 0].view(B, L, -1): each row has exactly L
        # masked positions; gather them (stable order) per batch row.
        # TODO(synk): could be moved in-kernel via PrefetchScalarGridSpec +
        # pl.Element row gather to skip materializing hs_mask in HBM.
        order = jnp.argsort(
            jnp.where(mlm_labels >= 0, 0, 1).astype(jnp.int32), axis=1, stable=True)
        idx = order[:, :L]                                              # (B, L)
        hs_mask = jnp.take_along_axis(hidden_states, idx[:, :, None], axis=1)

        logits_all = fused_vector_similarity(
            hs_mask, self.label2embed_all, self.similarity,
            matmul_dtype=self.matmul_dtype)                             # (B, C_total)

        return {name: logits_all[:, s:s + n]
                for name, (s, n) in self.head_slices.items()}


# ----------------------------------------------------------------------------
# Faithful float64 reference (original PyTorch formula, incl. torch eps form)
# ----------------------------------------------------------------------------
def _ref_similarity(hs_mask_np, lab_np, similarity):
    hs = np.asarray(hs_mask_np, np.float64)
    la = np.asarray(lab_np, np.float64)
    if similarity == "mm":
        return np.einsum("blh,clh->bc", hs, la)
    dot = np.einsum("blh,clh->bch", hs, la)
    n_hs = np.sqrt(np.sum(hs * hs, axis=1))
    n_lab = np.sqrt(np.sum(la * la, axis=1))
    denom = np.maximum(n_hs[:, None, :] * n_lab[None, :, :], 1e-6)
    return np.sum(dot / denom, axis=-1)


# ----------------------------------------------------------------------------
# Demo
# ----------------------------------------------------------------------------
if __name__ == "__main__":
    B, S, H, L = 2, 16, 32, 4            # batch, seq, hidden, len_label
    C_SUBJ, C_OBJ, C_REL = 8, 6, 5

    key = jax.random.PRNGKey(0)
    k_hs, k_s, k_o, k_r = jax.random.split(key, 4)

    # stands in for mlm(...).last_hidden_state
    hidden_states = jax.random.normal(k_hs, (B, S, H), jnp.float32)

    # "virtual prompt" label embeddings (label2embed parameters)
    subj_emb = jax.random.normal(k_s, (C_SUBJ, L, H), jnp.float32)
    obj_emb = jax.random.normal(k_o, (C_OBJ, L, H), jnp.float32)
    rel_emb = jax.random.normal(k_r, (C_REL, L, H), jnp.float32)

    # mlm_labels: exactly L non-negative entries per row marking prompt positions
    mlm_labels = jnp.full((B, S), -100, jnp.int32)
    mlm_labels = mlm_labels.at[0, 3:3 + L].set(1)
    mlm_labels = mlm_labels.at[1, 5:5 + L].set(2)

    # reference mask-gather (float64)
    order = jnp.argsort(
        jnp.where(mlm_labels >= 0, 0, 1).astype(jnp.int32), axis=1, stable=True)
    hs_mask_ref = np.asarray(
        jnp.take_along_axis(hidden_states, order[:, :L, None], axis=1), np.float64)

    head_embeds = {
        "subj": subj_emb,
        "obj": obj_emb,
        "rel/PERSON/ORG": rel_emb,
    }

    # float32 mode -> tight check of the kernel logic;
    # bfloat16 mode -> the production (perf) config, looser inference tolerance.
    for matmul_dtype, rtol, atol in ((jnp.float32, 2e-3, 2e-3),
                                     (jnp.bfloat16, 5e-2, 2.5e-1)):
        for similarity in ("mm", "cos"):
            model = FullModelPallas(
                subj_emb, obj_emb, {("PERSON", "ORG"): rel_emb},
                similarity=similarity, matmul_dtype=matmul_dtype)
            logits = model.predict_all(hidden_states, mlm_labels)
            logits = jax.block_until_ready(logits)

            for name, emb in head_embeds.items():
                ref = _ref_similarity(hs_mask_ref, np.asarray(emb, np.float64),
                                      similarity)
                np.testing.assert_allclose(
                    np.asarray(logits[name], np.float64), ref,
                    rtol=rtol, atol=atol,
                    err_msg=f"head={name} sim={similarity} dtype={matmul_dtype}")

    print("KERNEL_OK")
</pallas_src>

<mosaic_0001>
module attributes {stable_mosaic.version = 11 : i64} {
  func.func @_fused_similarity_kernel(%arg0: i32, %arg1: i32, %arg2: memref<8x4x32xf32, #tpu.memory_space<vmem>>, %arg3: memref<128x4x32xf32, #tpu.memory_space<vmem>>, %arg4: memref<8x128xf32, #tpu.memory_space<vmem>>) attributes {dimension_semantics = [#tpu.dimension_semantics<parallel>, #tpu.dimension_semantics<parallel>], iteration_bounds = array<i64: 1, 1>, scalar_prefetch = 0 : i64, scratch_operands = 0 : i64, tpu.core_type = #tpu.core_type<tc>, window_params = [{transform_indices = @transform_0, window_bounds = array<i64: 8, 4, 32>}, {transform_indices = @transform_1, window_bounds = array<i64: 128, 4, 32>}, {transform_indices = @transform_2, window_bounds = array<i64: 8, 128>}]} {
    %c0 = arith.constant 0 : index
    %c0_0 = arith.constant 0 : index
    %c0_1 = arith.constant 0 : index
    %0 = vector.load %arg2[%c0, %c0_0, %c0_1] : memref<8x4x32xf32, #tpu.memory_space<vmem>>, vector<8x4x32xf32>
    %c0_2 = arith.constant 0 : index
    %c0_3 = arith.constant 0 : index
    %c0_4 = arith.constant 0 : index
    %1 = vector.load %arg3[%c0_2, %c0_3, %c0_4] : memref<128x4x32xf32, #tpu.memory_space<vmem>>, vector<128x4x32xf32>
    %cst = arith.constant 0.000000e+00 : f32
    %2 = vector.broadcast %cst : f32 to vector<8x128xf32>
    %3 = vector.extract_strided_slice %0 {offsets = [0, 0, 0], sizes = [8, 1, 32], strides = [1, 1, 1]} : vector<8x4x32xf32> to vector<8x1x32xf32>
    %4 = vector.shape_cast %3 : vector<8x1x32xf32> to vector<8x32xf32>
    %5 = vector.extract_strided_slice %1 {offsets = [0, 0, 0], sizes = [128, 1, 32], strides = [1, 1, 1]} : vector<128x4x32xf32> to vector<128x1x32xf32>
    %6 = vector.shape_cast %5 : vector<128x1x32xf32> to vector<128x32xf32>
    %cst_5 = arith.constant dense<0.000000e+00> : vector<8x128xf32>
    %7 = tpu.matmul %4, %6, %cst_5 {dimension_numbers = #tpu.dot_dimension_numbers<[1], [1], [0], [0], [0, 0, 1, 0], [], []>} : vector<8x32xf32>, vector<128x32xf32>, vector<8x128xf32> -> vector<8x128xf32>
    %8 = arith.addf %2, %7 : vector<8x128xf32>
    %9 = vector.extract_strided_slice %0 {offsets = [0, 1, 0], sizes = [8, 1, 32], strides = [1, 1, 1]} : vector<8x4x32xf32> to vector<8x1x32xf32>
    %10 = vector.shape_cast %9 : vector<8x1x32xf32> to vector<8x32xf32>
    %11 = vector.extract_strided_slice %1 {offsets = [0, 1, 0], sizes = [128, 1, 32], strides = [1, 1, 1]} : vector<128x4x32xf32> to vector<128x1x32xf32>
    %12 = vector.shape_cast %11 : vector<128x1x32xf32> to vector<128x32xf32>
    %cst_6 = arith.constant dense<0.000000e+00> : vector<8x128xf32>
    %13 = tpu.matmul %10, %12, %cst_6 {dimension_numbers = #tpu.dot_dimension_numbers<[1], [1], [0], [0], [0, 0, 1, 0], [], []>} : vector<8x32xf32>, vector<128x32xf32>, vector<8x128xf32> -> vector<8x128xf32>
    %14 = arith.addf %8, %13 : vector<8x128xf32>
    %15 = vector.extract_strided_slice %0 {offsets = [0, 2, 0], sizes = [8, 1, 32], strides = [1, 1, 1]} : vector<8x4x32xf32> to vector<8x1x32xf32>
    %16 = vector.shape_cast %15 : vector<8x1x32xf32> to vector<8x32xf32>
    %17 = vector.extract_strided_slice %1 {offsets = [0, 2, 0], sizes = [128, 1, 32], strides = [1, 1, 1]} : vector<128x4x32xf32> to vector<128x1x32xf32>
    %18 = vector.shape_cast %17 : vector<128x1x32xf32> to vector<128x32xf32>
    %cst_7 = arith.constant dense<0.000000e+00> : vector<8x128xf32>
    %19 = tpu.matmul %16, %18, %cst_7 {dimension_numbers = #tpu.dot_dimension_numbers<[1], [1], [0], [0], [0, 0, 1, 0], [], []>} : vector<8x32xf32>, vector<128x32xf32>, vector<8x128xf32> -> vector<8x128xf32>
    %20 = arith.addf %14, %19 : vector<8x128xf32>
    %21 = vector.extract_strided_slice %0 {offsets = [0, 3, 0], sizes = [8, 1, 32], strides = [1, 1, 1]} : vector<8x4x32xf32> to vector<8x1x32xf32>
    %22 = vector.shape_cast %21 : vector<8x1x32xf32> to vector<8x32xf32>
    %23 = vector.extract_strided_slice %1 {offsets = [0, 3, 0], sizes = [128, 1, 32], strides = [1, 1, 1]} : vector<128x4x32xf32> to vector<128x1x32xf32>
    %24 = vector.shape_cast %23 : vector<128x1x32xf32> to vector<128x32xf32>
    %cst_8 = arith.constant dense<0.000000e+00> : vector<8x128xf32>
    %25 = tpu.matmul %22, %24, %cst_8 {dimension_numbers = #tpu.dot_dimension_numbers<[1], [1], [0], [0], [0, 0, 1, 0], [], []>} : vector<8x32xf32>, vector<128x32xf32>, vector<8x128xf32> -> vector<8x128xf32>
    %26 = arith.addf %20, %25 : vector<8x128xf32>
    %c0_9 = arith.constant 0 : index
    %c0_10 = arith.constant 0 : index
    %27 = vector.load %arg4[%c0_9, %c0_10] : memref<8x128xf32, #tpu.memory_space<vmem>>, vector<8x128xf32>
    tpu.vector_store %arg4[%c0_9, %c0_10], %26 {strides = array<i32>} : memref<8x128xf32, #tpu.memory_space<vmem>>, vector<8x128xf32>,
    return
  }
  func.func @transform_0(%arg0: i32, %arg1: i32) -> (i32, i32, i32) {
    %c0_i32 = arith.constant 0 : i32
    %c0_i32_0 = arith.constant 0 : i32
    %c0_i32_1 = arith.constant 0 : i32
    return %arg0, %c0_i32, %c0_i32_0 : i32, i32, i32
  }
  func.func @transform_1(%arg0: i32, %arg1: i32) -> (i32, i32, i32) {
    %c0_i32 = arith.constant 0 : i32
    %c0_i32_0 = arith.constant 0 : i32
    %c0_i32_1 = arith.constant 0 : i32
    return %arg1, %c0_i32, %c0_i32_0 : i32, i32, i32
  }
  func.func @transform_2(%arg0: i32, %arg1: i32) -> (i32, i32) {
    %c0_i32 = arith.constant 0 : i32
    return %arg0, %arg1 : i32, i32
  }
}

</mosaic_0001>

<llo_original>
// kernel: tpu_custom_call.1
$region0: #{tpu_custom_call.1}
  #allocation0 [shape = 'u32[]', space=smem, size = 0x4, offset = 0x4, fixed_abs, tag = 'smem constant byte address 0x4 - core index']
  #allocation1 [shape = 'u32[144,128]{1,0:T(1,128)}', space=vmem, size = 0x12000, scoped, tag = 'internal scratch']
  %s0 = inlined_call_operand.vmem [shape: f32[8,4,32], index: 0, kind: input, shape index: {}]
  %s1 = inlined_call_operand.vmem [shape: f32[128,4,32], index: 1, kind: input, shape index: {}]
  %s2 = inlined_call_operand.hbm [shape: f32[8,128], index: 2, kind: output, shape index: {}]
  %s3 = sld [smem:[#allocation0]]
  $region18: #{tpu_custom_call.1} parent=0
    _
  %s5 = ssub.s32 1, %s3
  %s6 = scalar_select 0, %s5, %s3
  $region1: #{tpu_custom_call.1} parent=0
    #allocation2 [shape = 'u8[4096]{0}', space=vmem, size = 0x1000, scoped, tag = 'output window, operand 0, single buffered']
    #allocation3 [shape = 's32[1]{0}', space=sflag, size = 0x4, scoped, tag = 'scoped memory for tpu_custom_call.1']
    %7 = vsyncpa [#allocation3], 0
    // Predicated region
    $region2: #{tpu_custom_call.1} parent=1 // pred_check
      _
    $region3: #{tpu_custom_call.1} parent=1 // pred_check_branch
      %9 = sbr.rel (0) target = $region5
    $region4: #{tpu_custom_call.1} parent=1 // pred_region
      _
    $region5: #{tpu_custom_call.1} parent=1 // pred_fallthru
      _
    // Predicated region
    $region6: #{tpu_custom_call.1} parent=1 // pred_check
      _
    $region7: #{tpu_custom_call.1} parent=1 // pred_check_branch
      %11 = sbr.rel (0) target = $region9
    $region8: #{tpu_custom_call.1} parent=1 // pred_region
      _
    $region9: #{tpu_custom_call.1} parent=1 // pred_fallthru
      _
    %v12 = vld [vmem:[%s0] sm:$0xf]
    %v13 = vld [vmem:[%s0 + $0x4] sm:$0xf]
    %v14 = vld [vmem:[%s0 + $0x8] sm:$0xf]
    %v15 = vld [vmem:[%s0 + $0xc] sm:$0xf]
    %v16 = vld [vmem:[%s0 + $0x10] sm:$0xf]
    %v17 = vld [vmem:[%s0 + $0x14] sm:$0xf]
    %v18 = vld [vmem:[%s0 + $0x18] sm:$0xf]
    %v19 = vld [vmem:[%s0 + $0x1c] sm:$0xf]
    %v20 = vld [vmem:[%s1] sm:$0xf]
    %v21 = vld [vmem:[%s1 + $0x4] sm:$0xf]
    %v22 = vld [vmem:[%s1 + $0x8] sm:$0xf]
    %v23 = vld [vmem:[%s1 + $0xc] sm:$0xf]
    %v24 = vld [vmem:[%s1 + $0x10] sm:$0xf]
    %v25 = vld [vmem:[%s1 + $0x14] sm:$0xf]
    %v26 = vld [vmem:[%s1 + $0x18] sm:$0xf]
    %v27 = vld [vmem:[%s1 + $0x1c] sm:$0xf]
    %v28 = vld [vmem:[%s1 + $0x20] sm:$0xf]
    %v29 = vld [vmem:[%s1 + $0x24] sm:$0xf]
    %v30 = vld [vmem:[%s1 + $0x28] sm:$0xf]
    %v31 = vld [vmem:[%s1 + $0x2c] sm:$0xf]
    %v32 = vld [vmem:[%s1 + $0x30] sm:$0xf]
    %v33 = vld [vmem:[%s1 + $0x34] sm:$0xf]
    %v34 = vld [vmem:[%s1 + $0x38] sm:$0xf]
    %v35 = vld [vmem:[%s1 + $0x3c] sm:$0xf]
    %v36 = vld [vmem:[%s1 + $0x40] sm:$0xf]
    %v37 = vld [vmem:[%s1 + $0x44] sm:$0xf]
    %v38 = vld [vmem:[%s1 + $0x48] sm:$0xf]
    %v39 = vld [vmem:[%s1 + $0x4c] sm:$0xf]
    %v40 = vld [vmem:[%s1 + $0x50] sm:$0xf]
    %v41 = vld [vmem:[%s1 + $0x54] sm:$0xf]
    %v42 = vld [vmem:[%s1 + $0x58] sm:$0xf]
    %v43 = vld [vmem:[%s1 + $0x5c] sm:$0xf]
    %v44 = vld [vmem:[%s1 + $0x60] sm:$0xf]
    %v45 = vld [vmem:[%s1 + $0x64] sm:$0xf]
    %v46 = vld [vmem:[%s1 + $0x68] sm:$0xf]
    %v47 = vld [vmem:[%s1 + $0x6c] sm:$0xf]
    %v48 = vld [vmem:[%s1 + $0x70] sm:$0xf]
    %v49 = vld [vmem:[%s1 + $0x74] sm:$0xf]
    %v50 = vld [vmem:[%s1 + $0x78] sm:$0xf]
    %v51 = vld [vmem:[%s1 + $0x7c] sm:$0xf]
    %v52 = vld [vmem:[%s1 + $0x80] sm:$0xf]
    %v53 = vld [vmem:[%s1 + $0x84] sm:$0xf]
    %v54 = vld [vmem:[%s1 + $0x88] sm:$0xf]
    %v55 = vld [vmem:[%s1 + $0x8c] sm:$0xf]
    %v56 = vld [vmem:[%s1 + $0x90] sm:$0xf]
    %v57 = vld [vmem:[%s1 + $0x94] sm:$0xf]
    %v58 = vld [vmem:[%s1 + $0x98] sm:$0xf]
    %v59 = vld [vmem:[%s1 + $0x9c] sm:$0xf]
    %v60 = vld [vmem:[%s1 + $0xa0] sm:$0xf]
    %v61 = vld [vmem:[%s1 + $0xa4] sm:$0xf]
    %v62 = vld [vmem:[%s1 + $0xa8] sm:$0xf]
    %v63 = vld [vmem:[%s1 + $0xac] sm:$0xf]
    %v64 = vld [vmem:[%s1 + $0xb0] sm:$0xf]
    %v65 = vld [vmem:[%s1 + $0xb4] sm:$0xf]
    %v66 = vld [vmem:[%s1 + $0xb8] sm:$0xf]
    %v67 = vld [vmem:[%s1 + $0xbc] sm:$0xf]
    %v68 = vld [vmem:[%s1 + $0xc0] sm:$0xf]
    %v69 = vld [vmem:[%s1 + $0xc4] sm:$0xf]
    %v70 = vld [vmem:[%s1 + $0xc8] sm:$0xf]
    %v71 = vld [vmem:[%s1 + $0xcc] sm:$0xf]
    %v72 = vld [vmem:[%s1 + $0xd0] sm:$0xf]
    %v73 = vld [vmem:[%s1 + $0xd4] sm:$0xf]
    %v74 = vld [vmem:[%s1 + $0xd8] sm:$0xf]
    %v75 = vld [vmem:[%s1 + $0xdc] sm:$0xf]
    %v76 = vld [vmem:[%s1 + $0xe0] sm:$0xf]
    %v77 = vld [vmem:[%s1 + $0xe4] sm:$0xf]
    %v78 = vld [vmem:[%s1 + $0xe8] sm:$0xf]
    %v79 = vld [vmem:[%s1 + $0xec] sm:$0xf]
    %v80 = vld [vmem:[%s1 + $0xf0] sm:$0xf]
    %v81 = vld [vmem:[%s1 + $0xf4] sm:$0xf]
    %v82 = vld [vmem:[%s1 + $0xf8] sm:$0xf]
    %v83 = vld [vmem:[%s1 + $0xfc] sm:$0xf]
    %v84 = vld [vmem:[%s1 + $0x100] sm:$0xf]
    %v85 = vld [vmem:[%s1 + $0x104] sm:$0xf]
    %v86 = vld [vmem:[%s1 + $0x108] sm:$0xf]
    %v87 = vld [vmem:[%s1 + $0x10c] sm:$0xf]
    %v88 = vld [vmem:[%s1 + $0x110] sm:$0xf]
    %v89 = vld [vmem:[%s1 + $0x114] sm:$0xf]
    %v90 = vld [vmem:[%s1 + $0x118] sm:$0xf]
    %v91 = vld [vmem:[%s1 + $0x11c] sm:$0xf]
    %v92 = vld [vmem:[%s1 + $0x120] sm:$0xf]
    %v93 = vld [vmem:[%s1 + $0x124] sm:$0xf]
    %v94 = vld [vmem:[%s1 + $0x128] sm:$0xf]
    %v95 = vld [vmem:[%s1 + $0x12c] sm:$0xf]
    %v96 = vld [vmem:[%s1 + $0x130] sm:$0xf]
    %v97 = vld [vmem:[%s1 + $0x134] sm:$0xf]
    %v98 = vld [vmem:[%s1 + $0x138] sm:$0xf]
    %v99 = vld [vmem:[%s1 + $0x13c] sm:$0xf]
    %v100 = vld [vmem:[%s1 + $0x140] sm:$0xf]
    %v101 = vld [vmem:[%s1 + $0x144] sm:$0xf]
    %v102 = vld [vmem:[%s1 + $0x148] sm:$0xf]
    %v103 = vld [vmem:[%s1 + $0x14c] sm:$0xf]
    %v104 = vld [vmem:[%s1 + $0x150] sm:$0xf]
    %v105 = vld [vmem:[%s1 + $0x154] sm:$0xf]
    %v106 = vld [vmem:[%s1 + $0x158] sm:$0xf]
    %v107 = vld [vmem:[%s1 + $0x15c] sm:$0xf]
    %v108 = vld [vmem:[%s1 + $0x160] sm:$0xf]
    %v109 = vld [vmem:[%s1 + $0x164] sm:$0xf]
    %v110 = vld [vmem:[%s1 + $0x168] sm:$0xf]
    %v111 = vld [vmem:[%s1 + $0x16c] sm:$0xf]
    %v112 = vld [vmem:[%s1 + $0x170] sm:$0xf]
    %v113 = vld [vmem:[%s1 + $0x174] sm:$0xf]
    %v114 = vld [vmem:[%s1 + $0x178] sm:$0xf]
    %v115 = vld [vmem:[%s1 + $0x17c] sm:$0xf]
    %v116 = vld [vmem:[%s1 + $0x180] sm:$0xf]
    %v117 = vld [vmem:[%s1 + $0x184] sm:$0xf]
    %v118 = vld [vmem:[%s1 + $0x188] sm:$0xf]
    %v119 = vld [vmem:[%s1 + $0x18c] sm:$0xf]
    %v120 = vld [vmem:[%s1 + $0x190] sm:$0xf]
    %v121 = vld [vmem:[%s1 + $0x194] sm:$0xf]
    %v122 = vld [vmem:[%s1 + $0x198] sm:$0xf]
    %v123 = vld [vmem:[%s1 + $0x19c] sm:$0xf]
    %v124 = vld [vmem:[%s1 + $0x1a0] sm:$0xf]
    %v125 = vld [vmem:[%s1 + $0x1a4] sm:$0xf]
    %v126 = vld [vmem:[%s1 + $0x1a8] sm:$0xf]
    %v127 = vld [vmem:[%s1 + $0x1ac] sm:$0xf]
    %v128 = vld [vmem:[%s1 + $0x1b0] sm:$0xf]
    %v129 = vld [vmem:[%s1 + $0x1b4] sm:$0xf]
    %v130 = vld [vmem:[%s1 + $0x1b8] sm:$0xf]
    %v131 = vld [vmem:[%s1 + $0x1bc] sm:$0xf]
    %v132 = vld [vmem:[%s1 + $0x1c0] sm:$0xf]
    %v133 = vld [vmem:[%s1 + $0x1c4] sm:$0xf]
    %v134 = vld [vmem:[%s1 + $0x1c8] sm:$0xf]
    %v135 = vld [vmem:[%s1 + $0x1cc] sm:$0xf]
    %v136 = vld [vmem:[%s1 + $0x1d0] sm:$0xf]
    %v137 = vld [vmem:[%s1 + $0x1d4] sm:$0xf]
    %v138 = vld [vmem:[%s1 + $0x1d8] sm:$0xf]
    %v139 = vld [vmem:[%s1 + $0x1dc] sm:$0xf]
    %v140 = vld [vmem:[%s1 + $0x1e0] sm:$0xf]
    %v141 = vld [vmem:[%s1 + $0x1e4] sm:$0xf]
    %v142 = vld [vmem:[%s1 + $0x1e8] sm:$0xf]
    %v143 = vld [vmem:[%s1 + $0x1ec] sm:$0xf]
    %v144 = vld [vmem:[%s1 + $0x1f0] sm:$0xf]
    %v145 = vld [vmem:[%s1 + $0x1f4] sm:$0xf]
    %v146 = vld [vmem:[%s1 + $0x1f8] sm:$0xf]
    %v147 = vld [vmem:[%s1 + $0x1fc] sm:$0xf]
    %v156 = vrot.slane %v12, 1
    %vm157 = vcmask 1041409
    %v158 = vsel %vm157, %v13, %v156
    %v159 = vrot.slane %v14, 7
    %vm160 = vcmask 1042434
    %v161 = vsel %vm160, %v159, %v158
    %v162 = vrot.slane %v15, 6
    %vm163 = vcmask 1043459
    %v164 = vsel %vm163, %v162, %v161
    %v165 = vrot.slane %v16, 5
    %vm166 = vcmask 1044484
    %v167 = vsel %vm166, %v165, %v164
    %v168 = vrot.slane %v17, 4
    %vm169 = vcmask 1045509
    %v170 = vsel %vm169, %v168, %v167
    %v171 = vrot.slane %v18, 3
    %vm172 = vcmask 1046534
    %v173 = vsel %vm172, %v171, %v170
    %v174 = vrot.slane %v19, 2
    %vm175 = vcmask 1047559
    %v176 = vsel %vm175, %v174, %v173
    %v305 = vrot.slane %v20, 1
    %v306 = vsel %vm157, %v21, %v305
    %v307 = vrot.slane %v22, 7
    %v308 = vsel %vm160, %v307, %v306
    %v309 = vrot.slane %v23, 6
    %v310 = vsel %vm163, %v309, %v308
    %v311 = vrot.slane %v24, 5
    %v312 = vsel %vm166, %v311, %v310
    %v313 = vrot.slane %v25, 4
    %v314 = vsel %vm169, %v313, %v312
    %v315 = vrot.slane %v26, 3
    %v316 = vsel %vm172, %v315, %v314
    %v317 = vrot.slane %v27, 2
    %v318 = vsel %vm175, %v317, %v316
    %v319 = vrot.slane %v28, 1
    %v320 = vsel %vm157, %v29, %v319
    %v321 = vrot.slane %v30, 7
    %v322 = vsel %vm160, %v321, %v320
    %v323 = vrot.slane %v31, 6
    %v324 = vsel %vm163, %v323, %v322
    %v325 = vrot.slane %v32, 5
    %v326 = vsel %vm166, %v325, %v324
    %v327 = vrot.slane %v33, 4
    %v328 = vsel %vm169, %v327, %v326
    %v329 = vrot.slane %v34, 3
    %v330 = vsel %vm172, %v329, %v328
    %v331 = vrot.slane %v35, 2
    %v332 = vsel %vm175, %v331, %v330
    %v333 = vrot.slane %v36, 1
    %v334 = vsel %vm157, %v37, %v333
    %v335 = vrot.slane %v38, 7
    %v336 = vsel %vm160, %v335, %v334
    %v337 = vrot.slane %v39, 6
    %v338 = vsel %vm163, %v337, %v336
    %v339 = vrot.slane %v40, 5
    %v340 = vsel %vm166, %v339, %v338
    %v341 = vrot.slane %v41, 4
    %v342 = vsel %vm169, %v341, %v340
    %v343 = vrot.slane %v42, 3
    %v344 = vsel %vm172, %v343, %v342
    %v345 = vrot.slane %v43, 2
    %v346 = vsel %vm175, %v345, %v344
    %v347 = vrot.slane %v44, 1
    %v348 = vsel %vm157, %v45, %v347
    %v349 = vrot.slane %v46, 7
    %v350 = vsel %vm160, %v349, %v348
    %v351 = vrot.slane %v47, 6
    %v352 = vsel %vm163, %v351, %v350
    %v353 = vrot.slane %v48, 5
    %v354 = vsel %vm166, %v353, %v352
    %v355 = vrot.slane %v49, 4
    %v356 = vsel %vm169, %v355, %v354
    %v357 = vrot.slane %v50, 3
    %v358 = vsel %vm172, %v357, %v356
    %v359 = vrot.slane %v51, 2
    %v360 = vsel %vm175, %v359, %v358
    %v361 = vrot.slane %v52, 1
    %v362 = vsel %vm157, %v53, %v361
    %v363 = vrot.slane %v54, 7
    %v364 = vsel %vm160, %v363, %v362
    %v365 = vrot.slane %v55, 6
    %v366 = vsel %vm163, %v365, %v364
    %v367 = vrot.slane %v56, 5
    %v368 = vsel %vm166, %v367, %v366
    %v369 = vrot.slane %v57, 4
    %v370 = vsel %vm169, %v369, %v368
    %v371 = vrot.slane %v58, 3
    %v372 = vsel %vm172, %v371, %v370
    %v373 = vrot.slane %v59, 2
    %v374 = vsel %vm175, %v373, %v372
    %v375 = vrot.slane %v60, 1
    %v376 = vsel %vm157, %v61, %v375
    %v377 = vrot.slane %v62, 7
    %v378 = vsel %vm160, %v377, %v376
    %v379 = vrot.slane %v63, 6
    %v380 = vsel %vm163, %v379, %v378
    %v381 = vrot.slane %v64, 5
    %v382 = vsel %vm166, %v381, %v380
    %v383 = vrot.slane %v65, 4
    %v384 = vsel %vm169, %v383, %v382
    %v385 = vrot.slane %v66, 3
    %v386 = vsel %vm172, %v385, %v384
    %v387 = vrot.slane %v67, 2
    %v388 = vsel %vm175, %v387, %v386
    %v389 = vrot.slane %v68, 1
    %v390 = vsel %vm157, %v69, %v389
    %v391 = vrot.slane %v70, 7
    %v392 = vsel %vm160, %v391, %v390
    %v393 = vrot.slane %v71, 6
    %v394 = vsel %vm163, %v393, %v392
    %v395 = vrot.slane %v72, 5
    %v396 = vsel %vm166, %v395, %v394
    %v397 = vrot.slane %v73, 4
    %v398 = vsel %vm169, %v397, %v396
    %v399 = vrot.slane %v74, 3
    %v400 = vsel %vm172, %v399, %v398
    %v401 = vrot.slane %v75, 2
    %v402 = vsel %vm175, %v401, %v400
    %v403 = vrot.slane %v76, 1
    %v404 = vsel %vm157, %v77, %v403
    %v405 = vrot.slane %v78, 7
    %v406 = vsel %vm160, %v405, %v404
    %v407 = vrot.slane %v79, 6
    %v408 = vsel %vm163, %v407, %v406
    %v409 = vrot.slane %v80, 5
    %v410 = vsel %vm166, %v409, %v408
    %v411 = vrot.slane %v81, 4
    %v412 = vsel %vm169, %v411, %v410
    %v413 = vrot.slane %v82, 3
    %v414 = vsel %vm172, %v413, %v412
    %v415 = vrot.slane %v83, 2
    %v416 = vsel %vm175, %v415, %v414
    %v417 = vrot.slane %v84, 1
    %v418 = vsel %vm157, %v85, %v417
    %v419 = vrot.slane %v86, 7
    %v420 = vsel %vm160, %v419, %v418
    %v421 = vrot.slane %v87, 6
    %v422 = vsel %vm163, %v421, %v420
    %v423 = vrot.slane %v88, 5
    %v424 = vsel %vm166, %v423, %v422
    %v425 = vrot.slane %v89, 4
    %v426 = vsel %vm169, %v425, %v424
    %v427 = vrot.slane %v90, 3
    %v428 = vsel %vm172, %v427, %v426
    %v429 = vrot.slane %v91, 2
    %v430 = vsel %vm175, %v429, %v428
    %v431 = vrot.slane %v92, 1
    %v432 = vsel %vm157, %v93, %v431
    %v433 = vrot.slane %v94, 7
    %v434 = vsel %vm160, %v433, %v432
    %v435 = vrot.slane %v95, 6
    %v436 = vsel %vm163, %v435, %v434
    %v437 = vrot.slane %v96, 5
    %v438 = vsel %vm166, %v437, %v436
    %v439 = vrot.slane %v97, 4
    %v440 = vsel %vm169, %v439, %v438
    %v441 = vrot.slane %v98, 3
    %v442 = vsel %vm172, %v441, %v440
    %v443 = vrot.slane %v99, 2
    %v444 = vsel %vm175, %v443, %v442
    %v445 = vrot.slane %v100, 1
    %v446 = vsel %vm157, %v101, %v445
    %v447 = vrot.slane %v102, 7
    %v448 = vsel %vm160, %v447, %v446
    %v449 = vrot.slane %v103, 6
    %v450 = vsel %vm163, %v449, %v448
    %v451 = vrot.slane %v104, 5
    %v452 = vsel %vm166, %v451, %v450
    %v453 = vrot.slane %v105, 4
    %v454 = vsel %vm169, %v453, %v452
    %v455 = vrot.slane %v106, 3
    %v456 = vsel %vm172, %v455, %v454
    %v457 = vrot.slane %v107, 2
    %v458 = vsel %vm175, %v457, %v456
    %v459 = vrot.slane %v108, 1
    %v460 = vsel %vm157, %v109, %v459
    %v461 = vrot.slane %v110, 7
    %v462 = vsel %vm160, %v461, %v460
    %v463 = vrot.slane %v111, 6
    %v464 = vsel %vm163, %v463, %v462
    %v465 = vrot.slane %v112, 5
    %v466 = vsel %vm166, %v465, %v464
    %v467 = vrot.slane %v113, 4
    %v468 = vsel %vm169, %v467, %v466
    %v469 = vrot.slane %v114, 3
    %v470 = vsel %vm172, %v469, %v468
    %v471 = vrot.slane %v115, 2
    %v472 = vsel %vm175, %v471, %v470
    %v473 = vrot.slane %v116, 1
    %v474 = vsel %vm157, %v117, %v473
    %v475 = vrot.slane %v118, 7
    %v476 = vsel %vm160, %v475, %v474
    %v477 = vrot.slane %v119, 6
    %v478 = vsel %vm163, %v477, %v476
    %v479 = vrot.slane %v120, 5
    %v480 = vsel %vm166, %v479, %v478
    %v481 = vrot.slane %v121, 4
    %v482 = vsel %vm169, %v481, %v480
    %v483 = vrot.slane %v122, 3
    %v484 = vsel %vm172, %v483, %v482
    %v485 = vrot.slane %v123, 2
    %v486 = vsel %vm175, %v485, %v484
    %v487 = vrot.slane %v124, 1
    %v488 = vsel %vm157, %v125, %v487
    %v489 = vrot.slane %v126, 7
    %v490 = vsel %vm160, %v489, %v488
    %v491 = vrot.slane %v127, 6
    %v492 = vsel %vm163, %v491, %v490
    %v493 = vrot.slane %v128, 5
    %v494 = vsel %vm166, %v493, %v492
    %v495 = vrot.slane %v129, 4
    %v496 = vsel %vm169, %v495, %v494
    %v497 = vrot.slane %v130, 3
    %v498 = vsel %vm172, %v497, %v496
    %v499 = vrot.slane %v131, 2
    %v500 = vsel %vm175, %v499, %v498
    %v501 = vrot.slane %v132, 1
    %v502 = vsel %vm157, %v133, %v501
    %v503 = vrot.slane %v134, 7
    %v504 = vsel %vm160, %v503, %v502
    %v505 = vrot.slane %v135, 6
    %v506 = vsel %vm163, %v505, %v504
    %v507 = vrot.slane %v136, 5
    %v508 = vsel %vm166, %v507, %v506
    %v509 = vrot.slane %v137, 4
    %v510 = vsel %vm169, %v509, %v508
    %v511 = vrot.slane %v138, 3
    %v512 = vsel %vm172, %v511, %v510
    %v513 = vrot.slane %v139, 2
    %v514 = vsel %vm175, %v513, %v512
    %v515 = vrot.slane %v140, 1
    %v516 = vsel %vm157, %v141, %v515
    %v517 = vrot.slane %v142, 7
    %v518 = vsel %vm160, %v517, %v516
    %v519 = vrot.slane %v143, 6
    %v520 = vsel %vm163, %v519, %v518
    %v521 = vrot.slane %v144, 5
    %v522 = vsel %vm166, %v521, %v520
    %v523 = vrot.slane %v145, 4
    %v524 = vsel %vm169, %v523, %v522
    %v525 = vrot.slane %v146, 3
    %v526 = vsel %vm172, %v525, %v524
    %v527 = vrot.slane %v147, 2
    %v528 = vsel %vm175, %v527, %v526
    %vm529 = vcmask 261120
    %v530 = vsel %vm529, %v176, 0
    %v532 = vsel %vm529, %v318, 0
    %v534 = vsel %vm529, %v332, 0
    %v536 = vsel %vm529, %v346, 0
    %v538 = vsel %vm529, %v360, 0
    %v540 = vsel %vm529, %v374, 0
    %v542 = vsel %vm529, %v388, 0
    %v544 = vsel %vm529, %v402, 0
    %v546 = vsel %vm529, %v416, 0
    %v548 = vsel %vm529, %v430, 0
    %v550 = vsel %vm529, %v444, 0
    %v552 = vsel %vm529, %v458, 0
    %v554 = vsel %vm529, %v472, 0
    %v556 = vsel %vm529, %v486, 0
    %v558 = vsel %vm529, %v500, 0
    %v560 = vsel %vm529, %v514, 0
    %v562 = vsel %vm529, %v528, 0
    %564 = vmatprep.subr.mxu0 0.0
    %565 = vmatpush1.xpose.msra.mxu0 %v532
    %566 = vmatprep.subr.mxu0 0.0
    %567 = vmatpush1.xpose.msra.mxu0 %v534
    %568 = vmatprep.subr.mxu0 0.0
    %569 = vmatpush1.xpose.msra.mxu0 %v536
    %570 = vmatprep.subr.mxu0 0.0
    %571 = vmatpush1.xpose.msra.mxu0 %v538
    %572 = vmatprep.subr.mxu0 0.0
    %573 = vmatpush1.xpose.msra.mxu0 %v540
    %574 = vmatprep.subr.mxu0 0.0
    %575 = vmatpush1.xpose.msra.mxu0 %v542
    %576 = vmatprep.subr.mxu0 0.0
    %577 = vmatpush1.xpose.msra.mxu0 %v544
    %578 = vmatprep.subr.mxu0 0.0
    %579 = vmatpush1.xpose.msra.mxu0 %v546
    %580 = vmatprep.subr.mxu0 0.0
    %581 = vmatpush1.xpose.msra.mxu0 %v548
    %582 = vmatprep.subr.mxu0 0.0
    %583 = vmatpush1.xpose.msra.mxu0 %v550
    %584 = vmatprep.subr.mxu0 0.0
    %585 = vmatpush1.xpose.msra.mxu0 %v552
    %586 = vmatprep.subr.mxu0 0.0
    %587 = vmatpush1.xpose.msra.mxu0 %v554
    %588 = vmatprep.subr.mxu0 0.0
    %589 = vmatpush1.xpose.msra.mxu0 %v556
    %590 = vmatprep.subr.mxu0 0.0
    %591 = vmatpush1.xpose.msra.mxu0 %v558
    %592 = vmatprep.subr.mxu0 0.0
    %593 = vmatpush1.xpose.msra.mxu0 %v560
    %594 = vmatprep.subr.mxu0 0.0
    %595 = vmatpush1.xpose.msra.mxu0 %v562
    %596 = vmatprep.subr.mxu0 0.0
    %597 = vmatpush1.xpose.msra.mxu0 0.0
    %598 = vmatprep.subr.mxu0 0.0
    %599 = vmatpush1.xpose.msra.mxu0 0.0
    %600 = vmatprep.subr.mxu0 0.0
    %601 = vmatpush1.xpose.msra.mxu0 0.0
    %602 = vmatprep.subr.mxu0 0.0
    %603 = vmatpush1.xpose.msra.mxu0 0.0
    %604 = vmatprep.subr.mxu0 0.0
    %605 = vmatpush1.xpose.msra.mxu0 0.0
    %606 = vmatprep.subr.mxu0 0.0
    %607 = vmatpush1.xpose.msra.mxu0 0.0
    %608 = vmatprep.subr.mxu0 0.0
    %609 = vmatpush1.xpose.msra.mxu0 0.0
    %610 = vmatprep.subr.mxu0 0.0
    %611 = vmatpush1.xpose.msra.mxu0 0.0
    %612 = vmatprep.subr.mxu0 0.0
    %613 = vmatpush1.xpose.msra.mxu0 0.0
    %614 = vmatprep.subr.mxu0 0.0
    %615 = vmatpush1.xpose.msra.mxu0 0.0
    %616 = vmatprep.subr.mxu0 0.0
    %617 = vmatpush1.xpose.msra.mxu0 0.0
    %618 = vmatprep.subr.mxu0 0.0
    %619 = vmatpush1.xpose.msra.mxu0 0.0
    %620 = vmatprep.subr.mxu0 0.0
    %621 = vmatpush1.xpose.msra.mxu0 0.0
    %622 = vmatprep.subr.mxu0 0.0
    %623 = vmatpush1.xpose.msra.mxu0 0.0
    %624 = vmatprep.subr.mxu0 0.0
    %625 = vmatpush1.xpose.msra.mxu0 0.0
    %626 = vmatprep.subr.mxu0 0.0
    %627 = vmatpush1.xpose.msra.mxu0 0.0
    %628 = vmatprep.mubr.f32.mxu0 0.0
    %629 = vmatmul.mubr.f32.gmra.mrb[0].mxu0 %v530
    %v630 = vpop.f32.mrb[0].mxu0
    %v631 = vadd.f32 0.0, %v630
    %v632 = vpop.f32.mrb[0].mxu0
    %633 = vdwg.mxu0
    %v634 = vrot.slane %v13, 7
    %v635 = vsel %vm157, %v634, %v12
    %v636 = vrot.slane %v14, 6
    %v637 = vsel %vm160, %v636, %v635
    %v638 = vrot.slane %v15, 5
    %v639 = vsel %vm163, %v638, %v637
    %v640 = vrot.slane %v16, 4
    %v641 = vsel %vm166, %v640, %v639
    %v642 = vrot.slane %v17, 3
    %v643 = vsel %vm169, %v642, %v641
    %v644 = vrot.slane %v18, 2
    %v645 = vsel %vm172, %v644, %v643
    %v646 = vrot.slane %v19, 1
    %v647 = vsel %vm175, %v646, %v645
    %v648 = vrot.slane %v21, 7
    %v649 = vsel %vm157, %v648, %v20
    %v650 = vrot.slane %v22, 6
    %v651 = vsel %vm160, %v650, %v649
    %v652 = vrot.slane %v23, 5
    %v653 = vsel %vm163, %v652, %v651
    %v654 = vrot.slane %v24, 4
    %v655 = vsel %vm166, %v654, %v653
    %v656 = vrot.slane %v25, 3
    %v657 = vsel %vm169, %v656, %v655
    %v658 = vrot.slane %v26, 2
    %v659 = vsel %vm172, %v658, %v657
    %v660 = vrot.slane %v27, 1
    %v661 = vsel %vm175, %v660, %v659
    %v662 = vrot.slane %v29, 7
    %v663 = vsel %vm157, %v662, %v28
    %v664 = vrot.slane %v30, 6
    %v665 = vsel %vm160, %v664, %v663
    %v666 = vrot.slane %v31, 5
    %v667 = vsel %vm163, %v666, %v665
    %v668 = vrot.slane %v32, 4
    %v669 = vsel %vm166, %v668, %v667
    %v670 = vrot.slane %v33, 3
    %v671 = vsel %vm169, %v670, %v669
    %v672 = vrot.slane %v34, 2
    %v673 = vsel %vm172, %v672, %v671
    %v674 = vrot.slane %v35, 1
    %v675 = vsel %vm175, %v674, %v673
    %v676 = vrot.slane %v37, 7
    %v677 = vsel %vm157, %v676, %v36
    %v678 = vrot.slane %v38, 6
    %v679 = vsel %vm160, %v678, %v677
    %v680 = vrot.slane %v39, 5
    %v681 = vsel %vm163, %v680, %v679
    %v682 = vrot.slane %v40, 4
    %v683 = vsel %vm166, %v682, %v681
    %v684 = vrot.slane %v41, 3
    %v685 = vsel %vm169, %v684, %v683
    %v686 = vrot.slane %v42, 2
    %v687 = vsel %vm172, %v686, %v685
    %v688 = vrot.slane %v43, 1
    %v689 = vsel %vm175, %v688, %v687
    %v690 = vrot.slane %v45, 7
    %v691 = vsel %vm157, %v690, %v44
    %v692 = vrot.slane %v46, 6
    %v693 = vsel %vm160, %v692, %v691
    %v694 = vrot.slane %v47, 5
    %v695 = vsel %vm163, %v694, %v693
    %v696 = vrot.slane %v48, 4
    %v697 = vsel %vm166, %v696, %v695
    %v698 = vrot.slane %v49, 3
    %v699 = vsel %vm169, %v698, %v697
    %v700 = vrot.slane %v50, 2
    %v701 = vsel %vm172, %v700, %v699
    %v702 = vrot.slane %v51, 1
    %v703 = vsel %vm175, %v702, %v701
    %v704 = vrot.slane %v53, 7
    %v705 = vsel %vm157, %v704, %v52
    %v706 = vrot.slane %v54, 6
    %v707 = vsel %vm160, %v706, %v705
    %v708 = vrot.slane %v55, 5
    %v709 = vsel %vm163, %v708, %v707
    %v710 = vrot.slane %v56, 4
    %v711 = vsel %vm166, %v710, %v709
    %v712 = vrot.slane %v57, 3
    %v713 = vsel %vm169, %v712, %v711
    %v714 = vrot.slane %v58, 2
    %v715 = vsel %vm172, %v714, %v713
    %v716 = vrot.slane %v59, 1
    %v717 = vsel %vm175, %v716, %v715
    %v718 = vrot.slane %v61, 7
    %v719 = vsel %vm157, %v718, %v60
    %v720 = vrot.slane %v62, 6
    %v721 = vsel %vm160, %v720, %v719
    %v722 = vrot.slane %v63, 5
    %v723 = vsel %vm163, %v722, %v721
    %v724 = vrot.slane %v64, 4
    %v725 = vsel %vm166, %v724, %v723
    %v726 = vrot.slane %v65, 3
    %v727 = vsel %vm169, %v726, %v725
    %v728 = vrot.slane %v66, 2
    %v729 = vsel %vm172, %v728, %v727
    %v730 = vrot.slane %v67, 1
    %v731 = vsel %vm175, %v730, %v729
    %v732 = vrot.slane %v69, 7
    %v733 = vsel %vm157, %v732, %v68
    %v734 = vrot.slane %v70, 6
    %v735 = vsel %vm160, %v734, %v733
    %v736 = vrot.slane %v71, 5
    %v737 = vsel %vm163, %v736, %v735
    %v738 = vrot.slane %v72, 4
    %v739 = vsel %vm166, %v738, %v737
    %v740 = vrot.slane %v73, 3
    %v741 = vsel %vm169, %v740, %v739
    %v742 = vrot.slane %v74, 2
    %v743 = vsel %vm172, %v742, %v741
    %v744 = vrot.slane %v75, 1
    %v745 = vsel %vm175, %v744, %v743
    %v746 = vrot.slane %v77, 7
    %v747 = vsel %vm157, %v746, %v76
    %v748 = vrot.slane %v78, 6
    %v749 = vsel %vm160, %v748, %v747
    %v750 = vrot.slane %v79, 5
    %v751 = vsel %vm163, %v750, %v749
    %v752 = vrot.slane %v80, 4
    %v753 = vsel %vm166, %v752, %v751
    %v754 = vrot.slane %v81, 3
    %v755 = vsel %vm169, %v754, %v753
    %v756 = vrot.slane %v82, 2
    %v757 = vsel %vm172, %v756, %v755
    %v758 = vrot.slane %v83, 1
    %v759 = vsel %vm175, %v758, %v757
    %v760 = vrot.slane %v85, 7
    %v761 = vsel %vm157, %v760, %v84
    %v762 = vrot.slane %v86, 6
    %v763 = vsel %vm160, %v762, %v761
    %v764 = vrot.slane %v87, 5
    %v765 = vsel %vm163, %v764, %v763
    %v766 = vrot.slane %v88, 4
    %v767 = vsel %vm166, %v766, %v765
    %v768 = vrot.slane %v89, 3
    %v769 = vsel %vm169, %v768, %v767
    %v770 = vrot.slane %v90, 2
    %v771 = vsel %vm172, %v770, %v769
    %v772 = vrot.slane %v91, 1
    %v773 = vsel %vm175, %v772, %v771
    %v774 = vrot.slane %v93, 7
    %v775 = vsel %vm157, %v774, %v92
    %v776 = vrot.slane %v94, 6
    %v777 = vsel %vm160, %v776, %v775
    %v778 = vrot.slane %v95, 5
    %v779 = vsel %vm163, %v778, %v777
    %v780 = vrot.slane %v96, 4
    %v781 = vsel %vm166, %v780, %v779
    %v782 = vrot.slane %v97, 3
    %v783 = vsel %vm169, %v782, %v781
    %v784 = vrot.slane %v98, 2
    %v785 = vsel %vm172, %v784, %v783
    %v786 = vrot.slane %v99, 1
    %v787 = vsel %vm175, %v786, %v785
    %v788 = vrot.slane %v101, 7
    %v789 = vsel %vm157, %v788, %v100
    %v790 = vrot.slane %v102, 6
    %v791 = vsel %vm160, %v790, %v789
    %v792 = vrot.slane %v103, 5
    %v793 = vsel %vm163, %v792, %v791
    %v794 = vrot.slane %v104, 4
    %v795 = vsel %vm166, %v794, %v793
    %v796 = vrot.slane %v105, 3
    %v797 = vsel %vm169, %v796, %v795
    %v798 = vrot.slane %v106, 2
    %v799 = vsel %vm172, %v798, %v797
    %v800 = vrot.slane %v107, 1
    %v801 = vsel %vm175, %v800, %v799
    %v802 = vrot.slane %v109, 7
    %v803 = vsel %vm157, %v802, %v108
    %v804 = vrot.slane %v110, 6
    %v805 = vsel %vm160, %v804, %v803
    %v806 = vrot.slane %v111, 5
    %v807 = vsel %vm163, %v806, %v805
    %v808 = vrot.slane %v112, 4
    %v809 = vsel %vm166, %v808, %v807
    %v810 = vrot.slane %v113, 3
    %v811 = vsel %vm169, %v810, %v809
    %v812 = vrot.slane %v114, 2
    %v813 = vsel %vm172, %v812, %v811
    %v814 = vrot.slane %v115, 1
    %v815 = vsel %vm175, %v814, %v813
    %v816 = vrot.slane %v117, 7
    %v817 = vsel %vm157, %v816, %v116
    %v818 = vrot.slane %v118, 6
    %v819 = vsel %vm160, %v818, %v817
    %v820 = vrot.slane %v119, 5
    %v821 = vsel %vm163, %v820, %v819
    %v822 = vrot.slane %v120, 4
    %v823 = vsel %vm166, %v822, %v821
    %v824 = vrot.slane %v121, 3
    %v825 = vsel %vm169, %v824, %v823
    %v826 = vrot.slane %v122, 2
    %v827 = vsel %vm172, %v826, %v825
    %v828 = vrot.slane %v123, 1
    %v829 = vsel %vm175, %v828, %v827
    %v830 = vrot.slane %v125, 7
    %v831 = vsel %vm157, %v830, %v124
    %v832 = vrot.slane %v126, 6
    %v833 = vsel %vm160, %v832, %v831
    %v834 = vrot.slane %v127, 5
    %v835 = vsel %vm163, %v834, %v833
    %v836 = vrot.slane %v128, 4
    %v837 = vsel %vm166, %v836, %v835
    %v838 = vrot.slane %v129, 3
    %v839 = vsel %vm169, %v838, %v837
    %v840 = vrot.slane %v130, 2
    %v841 = vsel %vm172, %v840, %v839
    %v842 = vrot.slane %v131, 1
    %v843 = vsel %vm175, %v842, %v841
    %v844 = vrot.slane %v133, 7
    %v845 = vsel %vm157, %v844, %v132
    %v846 = vrot.slane %v134, 6
    %v847 = vsel %vm160, %v846, %v845
    %v848 = vrot.slane %v135, 5
    %v849 = vsel %vm163, %v848, %v847
    %v850 = vrot.slane %v136, 4
    %v851 = vsel %vm166, %v850, %v849
    %v852 = vrot.slane %v137, 3
    %v853 = vsel %vm169, %v852, %v851
    %v854 = vrot.slane %v138, 2
    %v855 = vsel %vm172, %v854, %v853
    %v856 = vrot.slane %v139, 1
    %v857 = vsel %vm175, %v856, %v855
    %v858 = vrot.slane %v141, 7
    %v859 = vsel %vm157, %v858, %v140
    %v860 = vrot.slane %v142, 6
    %v861 = vsel %vm160, %v860, %v859
    %v862 = vrot.slane %v143, 5
    %v863 = vsel %vm163, %v862, %v861
    %v864 = vrot.slane %v144, 4
    %v865 = vsel %vm166, %v864, %v863
    %v866 = vrot.slane %v145, 3
    %v867 = vsel %vm169, %v866, %v865
    %v868 = vrot.slane %v146, 2
    %v869 = vsel %vm172, %v868, %v867
    %v870 = vrot.slane %v147, 1
    %v871 = vsel %vm175, %v870, %v869
    %v872 = vsel %vm529, %v647, 0
    %v874 = vsel %vm529, %v661, 0
    %v876 = vsel %vm529, %v675, 0
    %v878 = vsel %vm529, %v689, 0
    %v880 = vsel %vm529, %v703, 0
    %v882 = vsel %vm529, %v717, 0
    %v884 = vsel %vm529, %v731, 0
    %v886 = vsel %vm529, %v745, 0
    %v888 = vsel %vm529, %v759, 0
    %v890 = vsel %vm529, %v773, 0
    %v892 = vsel %vm529, %v787, 0
    %v894 = vsel %vm529, %v801, 0
    %v896 = vsel %vm529, %v815, 0
    %v898 = vsel %vm529, %v829, 0
    %v900 = vsel %vm529, %v843, 0
    %v902 = vsel %vm529, %v857, 0
    %v904 = vsel %vm529, %v871, 0
    %906 = vmatprep.subr.mxu0 0.0
    %907 = vmatpush1.xpose.msra.mxu0 %v874
    %908 = vmatprep.subr.mxu0 0.0
    %909 = vmatpush1.xpose.msra.mxu0 %v876
    %910 = vmatprep.subr.mxu0 0.0
    %911 = vmatpush1.xpose.msra.mxu0 %v878
    %912 = vmatprep.subr.mxu0 0.0
    %913 = vmatpush1.xpose.msra.mxu0 %v880
    %914 = vmatprep.subr.mxu0 0.0
    %915 = vmatpush1.xpose.msra.mxu0 %v882
    %916 = vmatprep.subr.mxu0 0.0
    %917 = vmatpush1.xpose.msra.mxu0 %v884
    %918 = vmatprep.subr.mxu0 0.0
    %919 = vmatpush1.xpose.msra.mxu0 %v886
    %920 = vmatprep.subr.mxu0 0.0
    %921 = vmatpush1.xpose.msra.mxu0 %v888
    %922 = vmatprep.subr.mxu0 0.0
    %923 = vmatpush1.xpose.msra.mxu0 %v890
    %924 = vmatprep.subr.mxu0 0.0
    %925 = vmatpush1.xpose.msra.mxu0 %v892
    %926 = vmatprep.subr.mxu0 0.0
    %927 = vmatpush1.xpose.msra.mxu0 %v894
    %928 = vmatprep.subr.mxu0 0.0
    %929 = vmatpush1.xpose.msra.mxu0 %v896
    %930 = vmatprep.subr.mxu0 0.0
    %931 = vmatpush1.xpose.msra.mxu0 %v898
    %932 = vmatprep.subr.mxu0 0.0
    %933 = vmatpush1.xpose.msra.mxu0 %v900
    %934 = vmatprep.subr.mxu0 0.0
    %935 = vmatpush1.xpose.msra.mxu0 %v902
    %936 = vmatprep.subr.mxu0 0.0
    %937 = vmatpush1.xpose.msra.mxu0 %v904
    %938 = vmatprep.subr.mxu0 0.0
    %939 = vmatpush1.xpose.msra.mxu0 0.0
    %940 = vmatprep.subr.mxu0 0.0
    %941 = vmatpush1.xpose.msra.mxu0 0.0
    %942 = vmatprep.subr.mxu0 0.0
    %943 = vmatpush1.xpose.msra.mxu0 0.0
    %944 = vmatprep.subr.mxu0 0.0
    %945 = vmatpush1.xpose.msra.mxu0 0.0
    %946 = vmatprep.subr.mxu0 0.0
    %947 = vmatpush1.xpose.msra.mxu0 0.0
    %948 = vmatprep.subr.mxu0 0.0
    %949 = vmatpush1.xpose.msra.mxu0 0.0
    %950 = vmatprep.subr.mxu0 0.0
    %951 = vmatpush1.xpose.msra.mxu0 0.0
    %952 = vmatprep.subr.mxu0 0.0
    %953 = vmatpush1.xpose.msra.mxu0 0.0
    %954 = vmatprep.subr.mxu0 0.0
    %955 = vmatpush1.xpose.msra.mxu0 0.0
    %956 = vmatprep.subr.mxu0 0.0
    %957 = vmatpush1.xpose.msra.mxu0 0.0
    %958 = vmatprep.subr.mxu0 0.0
    %959 = vmatpush1.xpose.msra.mxu0 0.0
    %960 = vmatprep.subr.mxu0 0.0
    %961 = vmatpush1.xpose.msra.mxu0 0.0
    %962 = vmatprep.subr.mxu0 0.0
    %963 = vmatpush1.xpose.msra.mxu0 0.0
    %964 = vmatprep.subr.mxu0 0.0
    %965 = vmatpush1.xpose.msra.mxu0 0.0
    %966 = vmatprep.subr.mxu0 0.0
    %967 = vmatpush1.xpose.msra.mxu0 0.0
    %968 = vmatprep.subr.mxu0 0.0
    %969 = vmatpush1.xpose.msra.mxu0 0.0
    %970 = vmatprep.mubr.f32.mxu0 0.0
    %971 = vmatmul.mubr.f32.gmra.mrb[0].mxu0 %v872
    %v972 = vpop.f32.mrb[0].mxu0
    %v973 = vadd.f32 %v631, %v972
    %v974 = vpop.f32.mrb[0].mxu0
    %975 = vdwg.mxu0
    %v976 = vrot.slane %v12, 2
    %v977 = vrot.slane %v13, 1
    %v978 = vsel %vm157, %v977, %v976
    %v979 = vsel %vm160, %v14, %v978
    %v980 = vrot.slane %v15, 7
    %v981 = vsel %vm163, %v980, %v979
    %v982 = vrot.slane %v16, 6
    %v983 = vsel %vm166, %v982, %v981
    %v984 = vrot.slane %v17, 5
    %v985 = vsel %vm169, %v984, %v983
    %v986 = vrot.slane %v18, 4
    %v987 = vsel %vm172, %v986, %v985
    %v988 = vrot.slane %v19, 3
    %v989 = vsel %vm175, %v988, %v987
    %v990 = vrot.slane %v20, 2
    %v991 = vrot.slane %v21, 1
    %v992 = vsel %vm157, %v991, %v990
    %v993 = vsel %vm160, %v22, %v992
    %v994 = vrot.slane %v23, 7
    %v995 = vsel %vm163, %v994, %v993
    %v996 = vrot.slane %v24, 6
    %v997 = vsel %vm166, %v996, %v995
    %v998 = vrot.slane %v25, 5
    %v999 = vsel %vm169, %v998, %v997
    %v1000 = vrot.slane %v26, 4
    %v1001 = vsel %vm172, %v1000, %v999
    %v1002 = vrot.slane %v27, 3
    %v1003 = vsel %vm175, %v1002, %v1001
    %v1004 = vrot.slane %v28, 2
    %v1005 = vrot.slane %v29, 1
    %v1006 = vsel %vm157, %v1005, %v1004
    %v1007 = vsel %vm160, %v30, %v1006
    %v1008 = vrot.slane %v31, 7
    %v1009 = vsel %vm163, %v1008, %v1007
    %v1010 = vrot.slane %v32, 6
    %v1011 = vsel %vm166, %v1010, %v1009
    %v1012 = vrot.slane %v33, 5
    %v1013 = vsel %vm169, %v1012, %v1011
    %v1014 = vrot.slane %v34, 4
    %v1015 = vsel %vm172, %v1014, %v1013
    %v1016 = vrot.slane %v35, 3
    %v1017 = vsel %vm175, %v1016, %v1015
    %v1018 = vrot.slane %v36, 2
    %v1019 = vrot.slane %v37, 1
    %v1020 = vsel %vm157, %v1019, %v1018
    %v1021 = vsel %vm160, %v38, %v1020
    %v1022 = vrot.slane %v39, 7
    %v1023 = vsel %vm163, %v1022, %v1021
    %v1024 = vrot.slane %v40, 6
    %v1025 = vsel %vm166, %v1024, %v1023
    %v1026 = vrot.slane %v41, 5
    %v1027 = vsel %vm169, %v1026, %v1025
    %v1028 = vrot.slane %v42, 4
    %v1029 = vsel %vm172, %v1028, %v1027
    %v1030 = vrot.slane %v43, 3
    %v1031 = vsel %vm175, %v1030, %v1029
    %v1032 = vrot.slane %v44, 2
    %v1033 = vrot.slane %v45, 1
    %v1034 = vsel %vm157, %v1033, %v1032
    %v1035 = vsel %vm160, %v46, %v1034
    %v1036 = vrot.slane %v47, 7
    %v1037 = vsel %vm163, %v1036, %v1035
    %v1038 = vrot.slane %v48, 6
    %v1039 = vsel %vm166, %v1038, %v1037
    %v1040 = vrot.slane %v49, 5
    %v1041 = vsel %vm169, %v1040, %v1039
    %v1042 = vrot.slane %v50, 4
    %v1043 = vsel %vm172, %v1042, %v1041
    %v1044 = vrot.slane %v51, 3
    %v1045 = vsel %vm175, %v1044, %v1043
    %v1046 = vrot.slane %v52, 2
    %v1047 = vrot.slane %v53, 1
    %v1048 = vsel %vm157, %v1047, %v1046
    %v1049 = vsel %vm160, %v54, %v1048
    %v1050 = vrot.slane %v55, 7
    %v1051 = vsel %vm163, %v1050, %v1049
    %v1052 = vrot.slane %v56, 6
    %v1053 = vsel %vm166, %v1052, %v1051
    %v1054 = vrot.slane %v57, 5
    %v1055 = vsel %vm169, %v1054, %v1053
    %v1056 = vrot.slane %v58, 4
    %v1057 = vsel %vm172, %v1056, %v1055
    %v1058 = vrot.slane %v59, 3
    %v1059 = vsel %vm175, %v1058, %v1057
    %v1060 = vrot.slane %v60, 2
    %v1061 = vrot.slane %v61, 1
    %v1062 = vsel %vm157, %v1061, %v1060
    %v1063 = vsel %vm160, %v62, %v1062
    %v1064 = vrot.slane %v63, 7
    %v1065 = vsel %vm163, %v1064, %v1063
    %v1066 = vrot.slane %v64, 6
    %v1067 = vsel %vm166, %v1066, %v1065
    %v1068 = vrot.slane %v65, 5
    %v1069 = vsel %vm169, %v1068, %v1067
    %v1070 = vrot.slane %v66, 4
    %v1071 = vsel %vm172, %v1070, %v1069
    %v1072 = vrot.slane %v67, 3
    %v1073 = vsel %vm175, %v1072, %v1071
    %v1074 = vrot.slane %v68, 2
    %v1075 = vrot.slane %v69, 1
    %v1076 = vsel %vm157, %v1075, %v1074
    %v1077 = vsel %vm160, %v70, %v1076
    %v1078 = vrot.slane %v71, 7
    %v1079 = vsel %vm163, %v1078, %v1077
    %v1080 = vrot.slane %v72, 6
    %v1081 = vsel %vm166, %v1080, %v1079
    %v1082 = vrot.slane %v73, 5
    %v1083 = vsel %vm169, %v1082, %v1081
    %v1084 = vrot.slane %v74, 4
    %v1085 = vsel %vm172, %v1084, %v1083
    %v1086 = vrot.slane %v75, 3
    %v1087 = vsel %vm175, %v1086, %v1085
    %v1088 = vrot.slane %v76, 2
    %v1089 = vrot.slane %v77, 1
    %v1090 = vsel %vm157, %v1089, %v1088
    %v1091 = vsel %vm160, %v78, %v1090
    %v1092 = vrot.slane %v79, 7
    %v1093 = vsel %vm163, %v1092, %v1091
    %v1094 = vrot.slane %v80, 6
    %v1095 = vsel %vm166, %v1094, %v1093
    %v1096 = vrot.slane %v81, 5
    %v1097 = vsel %vm169, %v1096, %v1095
    %v1098 = vrot.slane %v82, 4
    %v1099 = vsel %vm172, %v1098, %v1097
    %v1100 = vrot.slane %v83, 3
    %v1101 = vsel %vm175, %v1100, %v1099
    %v1102 = vrot.slane %v84, 2
    %v1103 = vrot.slane %v85, 1
    %v1104 = vsel %vm157, %v1103, %v1102
    %v1105 = vsel %vm160, %v86, %v1104
    %v1106 = vrot.slane %v87, 7
    %v1107 = vsel %vm163, %v1106, %v1105
    %v1108 = vrot.slane %v88, 6
    %v1109 = vsel %vm166, %v1108, %v1107
    %v1110 = vrot.slane %v89, 5
    %v1111 = vsel %vm169, %v1110, %v1109
    %v1112 = vrot.slane %v90, 4
    %v1113 = vsel %vm172, %v1112, %v1111
    %v1114 = vrot.slane %v91, 3
    %v1115 = vsel %vm175, %v1114, %v1113
    %v1116 = vrot.slane %v92, 2
    %v1117 = vrot.slane %v93, 1
    %v1118 = vsel %vm157, %v1117, %v1116
    %v1119 = vsel %vm160, %v94, %v1118
    %v1120 = vrot.slane %v95, 7
    %v1121 = vsel %vm163, %v1120, %v1119
    %v1122 = vrot.slane %v96, 6
    %v1123 = vsel %vm166, %v1122, %v1121
    %v1124 = vrot.slane %v97, 5
    %v1125 = vsel %vm169, %v1124, %v1123
    %v1126 = vrot.slane %v98, 4
    %v1127 = vsel %vm172, %v1126, %v1125
    %v1128 = vrot.slane %v99, 3
    %v1129 = vsel %vm175, %v1128, %v1127
    %v1130 = vrot.slane %v100, 2
    %v1131 = vrot.slane %v101, 1
    %v1132 = vsel %vm157, %v1131, %v1130
    %v1133 = vsel %vm160, %v102, %v1132
    %v1134 = vrot.slane %v103, 7
    %v1135 = vsel %vm163, %v1134, %v1133
    %v1136 = vrot.slane %v104, 6
    %v1137 = vsel %vm166, %v1136, %v1135
    %v1138 = vrot.slane %v105, 5
    %v1139 = vsel %vm169, %v1138, %v1137
    %v1140 = vrot.slane %v106, 4
    %v1141 = vsel %vm172, %v1140, %v1139
    %v1142 = vrot.slane %v107, 3
    %v1143 = vsel %vm175, %v1142, %v1141
    %v1144 = vrot.slane %v108, 2
    %v1145 = vrot.slane %v109, 1
    %v1146 = vsel %vm157, %v1145, %v1144
    %v1147 = vsel %vm160, %v110, %v1146
    %v1148 = vrot.slane %v111, 7
    %v1149 = vsel %vm163, %v1148, %v1147
    %v1150 = vrot.slane %v112, 6
    %v1151 = vsel %vm166, %v1150, %v1149
    %v1152 = vrot.slane %v113, 5
    %v1153 = vsel %vm169, %v1152, %v1151
    %v1154 = vrot.slane %v114, 4
    %v1155 = vsel %vm172, %v1154, %v1153
    %v1156 = vrot.slane %v115, 3
    %v1157 = vsel %vm175, %v1156, %v1155
    %v1158 = vrot.slane %v116, 2
    %v1159 = vrot.slane %v117, 1
    %v1160 = vsel %vm157, %v1159, %v1158
    %v1161 = vsel %vm160, %v118, %v1160
    %v1162 = vrot.slane %v119, 7
    %v1163 = vsel %vm163, %v1162, %v1161
    %v1164 = vrot.slane %v120, 6
    %v1165 = vsel %vm166, %v1164, %v1163
    %v1166 = vrot.slane %v121, 5
    %v1167 = vsel %vm169, %v1166, %v1165
    %v1168 = vrot.slane %v122, 4
    %v1169 = vsel %vm172, %v1168, %v1167
    %v1170 = vrot.slane %v123, 3
    %v1171 = vsel %vm175, %v1170, %v1169
    %v1172 = vrot.slane %v124, 2
    %v1173 = vrot.slane %v125, 1
    %v1174 = vsel %vm157, %v1173, %v1172
    %v1175 = vsel %vm160, %v126, %v1174
    %v1176 = vrot.slane %v127, 7
    %v1177 = vsel %vm163, %v1176, %v1175
    %v1178 = vrot.slane %v128, 6
    %v1179 = vsel %vm166, %v1178, %v1177
    %v1180 = vrot.slane %v129, 5
    %v1181 = vsel %vm169, %v1180, %v1179
    %v1182 = vrot.slane %v130, 4
    %v1183 = vsel %vm172, %v1182, %v1181
    %v1184 = vrot.slane %v131, 3
    %v1185 = vsel %vm175, %v1184, %v1183
    %v1186 = vrot.slane %v132, 2
    %v1187 = vrot.slane %v133, 1
    %v1188 = vsel %vm157, %v1187, %v1186
    %v1189 = vsel %vm160, %v134, %v1188
    %v1190 = vrot.slane %v135, 7
    %v1191 = vsel %vm163, %v1190, %v1189
    %v1192 = vrot.slane %v136, 6
    %v1193 = vsel %vm166, %v1192, %v1191
    %v1194 = vrot.slane %v137, 5
    %v1195 = vsel %vm169, %v1194, %v1193
    %v1196 = vrot.slane %v138, 4
    %v1197 = vsel %vm172, %v1196, %v1195
    %v1198 = vrot.slane %v139, 3
    %v1199 = vsel %vm175, %v1198, %v1197
    %v1200 = vrot.slane %v140, 2
    %v1201 = vrot.slane %v141, 1
    %v1202 = vsel %vm157, %v1201, %v1200
    %v1203 = vsel %vm160, %v142, %v1202
    %v1204 = vrot.slane %v143, 7
    %v1205 = vsel %vm163, %v1204, %v1203
    %v1206 = vrot.slane %v144, 6
    %v1207 = vsel %vm166, %v1206, %v1205
    %v1208 = vrot.slane %v145, 5
    %v1209 = vsel %vm169, %v1208, %v1207
    %v1210 = vrot.slane %v146, 4
    %v1211 = vsel %vm172, %v1210, %v1209
    %v1212 = vrot.slane %v147, 3
    %v1213 = vsel %vm175, %v1212, %v1211
    %v1214 = vsel %vm529, %v989, 0
    %v1216 = vsel %vm529, %v1003, 0
    %v1218 = vsel %vm529, %v1017, 0
    %v1220 = vsel %vm529, %v1031, 0
    %v1222 = vsel %vm529, %v1045, 0
    %v1224 = vsel %vm529, %v1059, 0
    %v1226 = vsel %vm529, %v1073, 0
    %v1228 = vsel %vm529, %v1087, 0
    %v1230 = vsel %vm529, %v1101, 0
    %v1232 = vsel %vm529, %v1115, 0
    %v1234 = vsel %vm529, %v1129, 0
    %v1236 = vsel %vm529, %v1143, 0
    %v1238 = vsel %vm529, %v1157, 0
    %v1240 = vsel %vm529, %v1171, 0
    %v1242 = vsel %vm529, %v1185, 0
    %v1244 = vsel %vm529, %v1199, 0
    %v1246 = vsel %vm529, %v1213, 0
    %1248 = vmatprep.subr.mxu0 0.0
    %1249 = vmatpush1.xpose.msra.mxu0 %v1216
    %1250 = vmatprep.subr.mxu0 0.0
    %1251 = vmatpush1.xpose.msra.mxu0 %v1218
    %1252 = vmatprep.subr.mxu0 0.0
    %1253 = vmatpush1.xpose.msra.mxu0 %v1220
    %1254 = vmatprep.subr.mxu0 0.0
    %1255 = vmatpush1.xpose.msra.mxu0 %v1222
    %1256 = vmatprep.subr.mxu0 0.0
    %1257 = vmatpush1.xpose.msra.mxu0 %v1224
    %1258 = vmatprep.subr.mxu0 0.0
    %1259 = vmatpush1.xpose.msra.mxu0 %v1226
    %1260 = vmatprep.subr.mxu0 0.0
    %1261 = vmatpush1.xpose.msra.mxu0 %v1228
    %1262 = vmatprep.subr.mxu0 0.0
    %1263 = vmatpush1.xpose.msra.mxu0 %v1230
    %1264 = vmatprep.subr.mxu0 0.0
    %1265 = vmatpush1.xpose.msra.mxu0 %v1232
    %1266 = vmatprep.subr.mxu0 0.0
    %1267 = vmatpush1.xpose.msra.mxu0 %v1234
    %1268 = vmatprep.subr.mxu0 0.0
    %1269 = vmatpush1.xpose.msra.mxu0 %v1236
    %1270 = vmatprep.subr.mxu0 0.0
    %1271 = vmatpush1.xpose.msra.mxu0 %v1238
    %1272 = vmatprep.subr.mxu0 0.0
    %1273 = vmatpush1.xpose.msra.mxu0 %v1240
    %1274 = vmatprep.subr.mxu0 0.0
    %1275 = vmatpush1.xpose.msra.mxu0 %v1242
    %1276 = vmatprep.subr.mxu0 0.0
    %1277 = vmatpush1.xpose.msra.mxu0 %v1244
    %1278 = vmatprep.subr.mxu0 0.0
    %1279 = vmatpush1.xpose.msra.mxu0 %v1246
    %1280 = vmatprep.subr.mxu0 0.0
    %1281 = vmatpush1.xpose.msra.mxu0 0.0
    %1282 = vmatprep.subr.mxu0 0.0
    %1283 = vmatpush1.xpose.msra.mxu0 0.0
    %1284 = vmatprep.subr.mxu0 0.0
    %1285 = vmatpush1.xpose.msra.mxu0 0.0
    %1286 = vmatprep.subr.mxu0 0.0
    %1287 = vmatpush1.xpose.msra.mxu0 0.0
    %1288 = vmatprep.subr.mxu0 0.0
    %1289 = vmatpush1.xpose.msra.mxu0 0.0
    %1290 = vmatprep.subr.mxu0 0.0
    %1291 = vmatpush1.xpose.msra.mxu0 0.0
    %1292 = vmatprep.subr.mxu0 0.0
    %1293 = vmatpush1.xpose.msra.mxu0 0.0
    %1294 = vmatprep.subr.mxu0 0.0
    %1295 = vmatpush1.xpose.msra.mxu0 0.0
    %1296 = vmatprep.subr.mxu0 0.0
    %1297 = vmatpush1.xpose.msra.mxu0 0.0
    %1298 = vmatprep.subr.mxu0 0.0
    %1299 = vmatpush1.xpose.msra.mxu0 0.0
    %1300 = vmatprep.subr.mxu0 0.0
    %1301 = vmatpush1.xpose.msra.mxu0 0.0
    %1302 = vmatprep.subr.mxu0 0.0
    %1303 = vmatpush1.xpose.msra.mxu0 0.0
    %1304 = vmatprep.subr.mxu0 0.0
    %1305 = vmatpush1.xpose.msra.mxu0 0.0
    %1306 = vmatprep.subr.mxu0 0.0
    %1307 = vmatpush1.xpose.msra.mxu0 0.0
    %1308 = vmatprep.subr.mxu0 0.0
    %1309 = vmatpush1.xpose.msra.mxu0 0.0
    %1310 = vmatprep.subr.mxu0 0.0
    %1311 = vmatpush1.xpose.msra.mxu0 0.0
    %1312 = vmatprep.mubr.f32.mxu0 0.0
    %1313 = vmatmul.mubr.f32.gmra.mrb[0].mxu0 %v1214
    %v1314 = vpop.f32.mrb[0].mxu0
    %v1315 = vadd.f32 0.0, %v1314
    %v1316 = vpop.f32.mrb[0].mxu0
    %1317 = vdwg.mxu0
    %v1318 = vadd.f32 %v973, %v1315
    %v1319 = vrot.slane %v12, 3
    %v1320 = vrot.slane %v13, 2
    %v1321 = vsel %vm157, %v1320, %v1319
    %v1322 = vrot.slane %v14, 1
    %v1323 = vsel %vm160, %v1322, %v1321
    %v1324 = vsel %vm163, %v15, %v1323
    %v1325 = vrot.slane %v16, 7
    %v1326 = vsel %vm166, %v1325, %v1324
    %v1327 = vrot.slane %v17, 6
    %v1328 = vsel %vm169, %v1327, %v1326
    %v1329 = vrot.slane %v18, 5
    %v1330 = vsel %vm172, %v1329, %v1328
    %v1331 = vrot.slane %v19, 4
    %v1332 = vsel %vm175, %v1331, %v1330
    %v1333 = vrot.slane %v20, 3
    %v1334 = vrot.slane %v21, 2
    %v1335 = vsel %vm157, %v1334, %v1333
    %v1336 = vrot.slane %v22, 1
    %v1337 = vsel %vm160, %v1336, %v1335
    %v1338 = vsel %vm163, %v23, %v1337
    %v1339 = vrot.slane %v24, 7
    %v1340 = vsel %vm166, %v1339, %v1338
    %v1341 = vrot.slane %v25, 6
    %v1342 = vsel %vm169, %v1341, %v1340
    %v1343 = vrot.slane %v26, 5
    %v1344 = vsel %vm172, %v1343, %v1342
    %v1345 = vrot.slane %v27, 4
    %v1346 = vsel %vm175, %v1345, %v1344
    %v1347 = vrot.slane %v28, 3
    %v1348 = vrot.slane %v29, 2
    %v1349 = vsel %vm157, %v1348, %v1347
    %v1350 = vrot.slane %v30, 1
    %v1351 = vsel %vm160, %v1350, %v1349
    %v1352 = vsel %vm163, %v31, %v1351
    %v1353 = vrot.slane %v32, 7
    %v1354 = vsel %vm166, %v1353, %v1352
    %v1355 = vrot.slane %v33, 6
    %v1356 = vsel %vm169, %v1355, %v1354
    %v1357 = vrot.slane %v34, 5
    %v1358 = vsel %vm172, %v1357, %v1356
    %v1359 = vrot.slane %v35, 4
    %v1360 = vsel %vm175, %v1359, %v1358
    %v1361 = vrot.slane %v36, 3
    %v1362 = vrot.slane %v37, 2
    %v1363 = vsel %vm157, %v1362, %v1361
    %v1364 = vrot.slane %v38, 1
    %v1365 = vsel %vm160, %v1364, %v1363
    %v1366 = vsel %vm163, %v39, %v1365
    %v1367 = vrot.slane %v40, 7
    %v1368 = vsel %vm166, %v1367, %v1366
    %v1369 = vrot.slane %v41, 6
    %v1370 = vsel %vm169, %v1369, %v1368
    %v1371 = vrot.slane %v42, 5
    %v1372 = vsel %vm172, %v1371, %v1370
    %v1373 = vrot.slane %v43, 4
    %v1374 = vsel %vm175, %v1373, %v1372
    %v1375 = vrot.slane %v44, 3
    %v1376 = vrot.slane %v45, 2
    %v1377 = vsel %vm157, %v1376, %v1375
    %v1378 = vrot.slane %v46, 1
    %v1379 = vsel %vm160, %v1378, %v1377
    %v1380 = vsel %vm163, %v47, %v1379
    %v1381 = vrot.slane %v48, 7
    %v1382 = vsel %vm166, %v1381, %v1380
    %v1383 = vrot.slane %v49, 6
    %v1384 = vsel %vm169, %v1383, %v1382
    %v1385 = vrot.slane %v50, 5
    %v1386 = vsel %vm172, %v1385, %v1384
    %v1387 = vrot.slane %v51, 4
    %v1388 = vsel %vm175, %v1387, %v1386
    %v1389 = vrot.slane %v52, 3
    %v1390 = vrot.slane %v53, 2
    %v1391 = vsel %vm157, %v1390, %v1389
    %v1392 = vrot.slane %v54, 1
    %v1393 = vsel %vm160, %v1392, %v1391
    %v1394 = vsel %vm163, %v55, %v1393
    %v1395 = vrot.slane %v56, 7
    %v1396 = vsel %vm166, %v1395, %v1394
    %v1397 = vrot.slane %v57, 6
    %v1398 = vsel %vm169, %v1397, %v1396
    %v1399 = vrot.slane %v58, 5
    %v1400 = vsel %vm172, %v1399, %v1398
    %v1401 = vrot.slane %v59, 4
    %v1402 = vsel %vm175, %v1401, %v1400
    %v1403 = vrot.slane %v60, 3
    %v1404 = vrot.slane %v61, 2
    %v1405 = vsel %vm157, %v1404, %v1403
    %v1406 = vrot.slane %v62, 1
    %v1407 = vsel %vm160, %v1406, %v1405
    %v1408 = vsel %vm163, %v63, %v1407
    %v1409 = vrot.slane %v64, 7
    %v1410 = vsel %vm166, %v1409, %v1408
    %v1411 = vrot.slane %v65, 6
    %v1412 = vsel %vm169, %v1411, %v1410
    %v1413 = vrot.slane %v66, 5
    %v1414 = vsel %vm172, %v1413, %v1412
    %v1415 = vrot.slane %v67, 4
    %v1416 = vsel %vm175, %v1415, %v1414
    %v1417 = vrot.slane %v68, 3
    %v1418 = vrot.slane %v69, 2
    %v1419 = vsel %vm157, %v1418, %v1417
    %v1420 = vrot.slane %v70, 1
    %v1421 = vsel %vm160, %v1420, %v1419
    %v1422 = vsel %vm163, %v71, %v1421
    %v1423 = vrot.slane %v72, 7
    %v1424 = vsel %vm166, %v1423, %v1422
    %v1425 = vrot.slane %v73, 6
    %v1426 = vsel %vm169, %v1425, %v1424
    %v1427 = vrot.slane %v74, 5
    %v1428 = vsel %vm172, %v1427, %v1426
    %v1429 = vrot.slane %v75, 4
    %v1430 = vsel %vm175, %v1429, %v1428
    %v1431 = vrot.slane %v76, 3
    %v1432 = vrot.slane %v77, 2
    %v1433 = vsel %vm157, %v1432, %v1431
    %v1434 = vrot.slane %v78, 1
    %v1435 = vsel %vm160, %v1434, %v1433
    %v1436 = vsel %vm163, %v79, %v1435
    %v1437 = vrot.slane %v80, 7
    %v1438 = vsel %vm166, %v1437, %v1436
    %v1439 = vrot.slane %v81, 6
    %v1440 = vsel %vm169, %v1439, %v1438
    %v1441 = vrot.slane %v82, 5
    %v1442 = vsel %vm172, %v1441, %v1440
    %v1443 = vrot.slane %v83, 4
    %v1444 = vsel %vm175, %v1443, %v1442
    %v1445 = vrot.slane %v84, 3
    %v1446 = vrot.slane %v85, 2
    %v1447 = vsel %vm157, %v1446, %v1445
    %v1448 = vrot.slane %v86, 1
    %v1449 = vsel %vm160, %v1448, %v1447
    %v1450 = vsel %vm163, %v87, %v1449
    %v1451 = vrot.slane %v88, 7
    %v1452 = vsel %vm166, %v1451, %v1450
    %v1453 = vrot.slane %v89, 6
    %v1454 = vsel %vm169, %v1453, %v1452
    %v1455 = vrot.slane %v90, 5
    %v1456 = vsel %vm172, %v1455, %v1454
    %v1457 = vrot.slane %v91, 4
    %v1458 = vsel %vm175, %v1457, %v1456
    %v1459 = vrot.slane %v92, 3
    %v1460 = vrot.slane %v93, 2
    %v1461 = vsel %vm157, %v1460, %v1459
    %v1462 = vrot.slane %v94, 1
    %v1463 = vsel %vm160, %v1462, %v1461
    %v1464 = vsel %vm163, %v95, %v1463
    %v1465 = vrot.slane %v96, 7
    %v1466 = vsel %vm166, %v1465, %v1464
    %v1467 = vrot.slane %v97, 6
    %v1468 = vsel %vm169, %v1467, %v1466
    %v1469 = vrot.slane %v98, 5
    %v1470 = vsel %vm172, %v1469, %v1468
    %v1471 = vrot.slane %v99, 4
    %v1472 = vsel %vm175, %v1471, %v1470
    %v1473 = vrot.slane %v100, 3
    %v1474 = vrot.slane %v101, 2
    %v1475 = vsel %vm157, %v1474, %v1473
    %v1476 = vrot.slane %v102, 1
    %v1477 = vsel %vm160, %v1476, %v1475
    %v1478 = vsel %vm163, %v103, %v1477
    %v1479 = vrot.slane %v104, 7
    %v1480 = vsel %vm166, %v1479, %v1478
    %v1481 = vrot.slane %v105, 6
    %v1482 = vsel %vm169, %v1481, %v1480
    %v1483 = vrot.slane %v106, 5
    %v1484 = vsel %vm172, %v1483, %v1482
    %v1485 = vrot.slane %v107, 4
    %v1486 = vsel %vm175, %v1485, %v1484
    %v1487 = vrot.slane %v108, 3
    %v1488 = vrot.slane %v109, 2
    %v1489 = vsel %vm157, %v1488, %v1487
    %v1490 = vrot.slane %v110, 1
    %v1491 = vsel %vm160, %v1490, %v1489
    %v1492 = vsel %vm163, %v111, %v1491
    %v1493 = vrot.slane %v112, 7
    %v1494 = vsel %vm166, %v1493, %v1492
    %v1495 = vrot.slane %v113, 6
    %v1496 = vsel %vm169, %v1495, %v1494
    %v1497 = vrot.slane %v114, 5
    %v1498 = vsel %vm172, %v1497, %v1496
    %v1499 = vrot.slane %v115, 4
    %v1500 = vsel %vm175, %v1499, %v1498
    %v1501 = vrot.slane %v116, 3
    %v1502 = vrot.slane %v117, 2
    %v1503 = vsel %vm157, %v1502, %v1501
    %v1504 = vrot.slane %v118, 1
    %v1505 = vsel %vm160, %v1504, %v1503
    %v1506 = vsel %vm163, %v119, %v1505
    %v1507 = vrot.slane %v120, 7
    %v1508 = vsel %vm166, %v1507, %v1506
    %v1509 = vrot.slane %v121, 6
    %v1510 = vsel %vm169, %v1509, %v1508
    %v1511 = vrot.slane %v122, 5
    %v1512 = vsel %vm172, %v1511, %v1510
    %v1513 = vrot.slane %v123, 4
    %v1514 = vsel %vm175, %v1513, %v1512
    %v1515 = vrot.slane %v124, 3
    %v1516 = vrot.slane %v125, 2
    %v1517 = vsel %vm157, %v1516, %v1515
    %v1518 = vrot.slane %v126, 1
    %v1519 = vsel %vm160, %v1518, %v1517
    %v1520 = vsel %vm163, %v127, %v1519
    %v1521 = vrot.slane %v128, 7
    %v1522 = vsel %vm166, %v1521, %v1520
    %v1523 = vrot.slane %v129, 6
    %v1524 = vsel %vm169, %v1523, %v1522
    %v1525 = vrot.slane %v130, 5
    %v1526 = vsel %vm172, %v1525, %v1524
    %v1527 = vrot.slane %v131, 4
    %v1528 = vsel %vm175, %v1527, %v1526
    %v1529 = vrot.slane %v132, 3
    %v1530 = vrot.slane %v133, 2
    %v1531 = vsel %vm157, %v1530, %v1529
    %v1532 = vrot.slane %v134, 1
    %v1533 = vsel %vm160, %v1532, %v1531
    %v1534 = vsel %vm163, %v135, %v1533
    %v1535 = vrot.slane %v136, 7
    %v1536 = vsel %vm166, %v1535, %v1534
    %v1537 = vrot.slane %v137, 6
    %v1538 = vsel %vm169, %v1537, %v1536
    %v1539 = vrot.slane %v138, 5
    %v1540 = vsel %vm172, %v1539, %v1538
    %v1541 = vrot.slane %v139, 4
    %v1542 = vsel %vm175, %v1541, %v1540
    %v1543 = vrot.slane %v140, 3
    %v1544 = vrot.slane %v141, 2
    %v1545 = vsel %vm157, %v1544, %v1543
    %v1546 = vrot.slane %v142, 1
    %v1547 = vsel %vm160, %v1546, %v1545
    %v1548 = vsel %vm163, %v143, %v1547
    %v1549 = vrot.slane %v144, 7
    %v1550 = vsel %vm166, %v1549, %v1548
    %v1551 = vrot.slane %v145, 6
    %v1552 = vsel %vm169, %v1551, %v1550
    %v1553 = vrot.slane %v146, 5
    %v1554 = vsel %vm172, %v1553, %v1552
    %v1555 = vrot.slane %v147, 4
    %v1556 = vsel %vm175, %v1555, %v1554
    %v1557 = vsel %vm529, %v1332, 0
    %v1559 = vsel %vm529, %v1346, 0
    %v1561 = vsel %vm529, %v1360, 0
    %v1563 = vsel %vm529, %v1374, 0
    %v1565 = vsel %vm529, %v1388, 0
    %v1567 = vsel %vm529, %v1402, 0
    %v1569 = vsel %vm529, %v1416, 0
    %v1571 = vsel %vm529, %v1430, 0
    %v1573 = vsel %vm529, %v1444, 0
    %v1575 = vsel %vm529, %v1458, 0
    %v1577 = vsel %vm529, %v1472, 0
    %v1579 = vsel %vm529, %v1486, 0
    %v1581 = vsel %vm529, %v1500, 0
    %v1583 = vsel %vm529, %v1514, 0
    %v1585 = vsel %vm529, %v1528, 0
    %v1587 = vsel %vm529, %v1542, 0
    %v1589 = vsel %vm529, %v1556, 0
    %1591 = vmatprep.subr.mxu0 0.0
    %1592 = vmatpush1.xpose.msra.mxu0 %v1559
    %1593 = vmatprep.subr.mxu0 0.0
    %1594 = vmatpush1.xpose.msra.mxu0 %v1561
    %1595 = vmatprep.subr.mxu0 0.0
    %1596 = vmatpush1.xpose.msra.mxu0 %v1563
    %1597 = vmatprep.subr.mxu0 0.0
    %1598 = vmatpush1.xpose.msra.mxu0 %v1565
    %1599 = vmatprep.subr.mxu0 0.0
    %1600 = vmatpush1.xpose.msra.mxu0 %v1567
    %1601 = vmatprep.subr.mxu0 0.0
    %1602 = vmatpush1.xpose.msra.mxu0 %v1569
    %1603 = vmatprep.subr.mxu0 0.0
    %1604 = vmatpush1.xpose.msra.mxu0 %v1571
    %1605 = vmatprep.subr.mxu0 0.0
    %1606 = vmatpush1.xpose.msra.mxu0 %v1573
    %1607 = vmatprep.subr.mxu0 0.0
    %1608 = vmatpush1.xpose.msra.mxu0 %v1575
    %1609 = vmatprep.subr.mxu0 0.0
    %1610 = vmatpush1.xpose.msra.mxu0 %v1577
    %1611 = vmatprep.subr.mxu0 0.0
    %1612 = vmatpush1.xpose.msra.mxu0 %v1579
    %1613 = vmatprep.subr.mxu0 0.0
    %1614 = vmatpush1.xpose.msra.mxu0 %v1581
    %1615 = vmatprep.subr.mxu0 0.0
    %1616 = vmatpush1.xpose.msra.mxu0 %v1583
    %1617 = vmatprep.subr.mxu0 0.0
    %1618 = vmatpush1.xpose.msra.mxu0 %v1585
    %1619 = vmatprep.subr.mxu0 0.0
    %1620 = vmatpush1.xpose.msra.mxu0 %v1587
    %1621 = vmatprep.subr.mxu0 0.0
    %1622 = vmatpush1.xpose.msra.mxu0 %v1589
    %1623 = vmatprep.subr.mxu0 0.0
    %1624 = vmatpush1.xpose.msra.mxu0 0.0
    %1625 = vmatprep.subr.mxu0 0.0
    %1626 = vmatpush1.xpose.msra.mxu0 0.0
    %1627 = vmatprep.subr.mxu0 0.0
    %1628 = vmatpush1.xpose.msra.mxu0 0.0
    %1629 = vmatprep.subr.mxu0 0.0
    %1630 = vmatpush1.xpose.msra.mxu0 0.0
    %1631 = vmatprep.subr.mxu0 0.0
    %1632 = vmatpush1.xpose.msra.mxu0 0.0
    %1633 = vmatprep.subr.mxu0 0.0
    %1634 = vmatpush1.xpose.msra.mxu0 0.0
    %1635 = vmatprep.subr.mxu0 0.0
    %1636 = vmatpush1.xpose.msra.mxu0 0.0
    %1637 = vmatprep.subr.mxu0 0.0
    %1638 = vmatpush1.xpose.msra.mxu0 0.0
    %1639 = vmatprep.subr.mxu0 0.0
    %1640 = vmatpush1.xpose.msra.mxu0 0.0
    %1641 = vmatprep.subr.mxu0 0.0
    %1642 = vmatpush1.xpose.msra.mxu0 0.0
    %1643 = vmatprep.subr.mxu0 0.0
    %1644 = vmatpush1.xpose.msra.mxu0 0.0
    %1645 = vmatprep.subr.mxu0 0.0
    %1646 = vmatpush1.xpose.msra.mxu0 0.0
    %1647 = vmatprep.subr.mxu0 0.0
    %1648 = vmatpush1.xpose.msra.mxu0 0.0
    %1649 = vmatprep.subr.mxu0 0.0
    %1650 = vmatpush1.xpose.msra.mxu0 0.0
    %1651 = vmatprep.subr.mxu0 0.0
    %1652 = vmatpush1.xpose.msra.mxu0 0.0
    %1653 = vmatprep.subr.mxu0 0.0
    %1654 = vmatpush1.xpose.msra.mxu0 0.0
    %1655 = vmatprep.mubr.f32.mxu0 0.0
    %1656 = vmatmul.mubr.f32.gmra.mrb[0].mxu0 %v1557
    %v1657 = vpop.f32.mrb[0].mxu0
    %v1658 = vadd.f32 0.0, %v1657
    %v1659 = vpop.f32.mrb[0].mxu0
    %1660 = vdwg.mxu0
    %v1661 = vadd.f32 %v1318, %v1658
    %1662 = vst [vmem:[#allocation2] sm:$0xff] %v1661
    // Predicated region
    $region10: #{tpu_custom_call.1} parent=1 // pred_check
      _
    $region11: #{tpu_custom_call.1} parent=1 // pred_check_branch
      %1664 = sbr.rel (0) target = $region13
    $region12: #{tpu_custom_call.1} parent=1 // pred_region
      %s1666 = ssub.s32 128, 128
      %1667 = vsyncadd [#allocation3], %s1666
      %s1669 = sshll.u32 [#allocation2], 4
      %s1670 = int_to_ptr.vmem [resolvable:$true] %s1669
      %1672 = dma.vmem_to_hbm [thread:$0]  %s1670, 128, %s2, [#allocation3]
    $region13: #{tpu_custom_call.1} parent=1 // pred_fallthru
      _
    // Predicated region
    $region14: #{tpu_custom_call.1} parent=1 // pred_check
      _
    $region15: #{tpu_custom_call.1} parent=1 // pred_check_branch
      %1674 = sbr.rel (0) target = $region17
    $region16: #{tpu_custom_call.1} parent=1 // pred_region
      %1675 = dma.done [#allocation3], 128
    $region17: #{tpu_custom_call.1} parent=1 // pred_fallthru
      _
    %1676 = vsyncpa [#allocation3], 1

</llo_original>
